<compile_context>
chip_gen: v5e
topology: v5e:2x2
jax: 0.10.0
libtpu: 0.0.40
codegen_flags: <defaults>
</compile_context>

<pallas_src>
import functools

import jax
import jax.numpy as jnp
from jax.experimental import pallas as pl
from jax.experimental.pallas import tpu as pltpu

LANE = 128      # lane width: last-dim alignment
SUBLANE = 8     # sublane width: second-to-last-dim alignment (f32)


def _round_up(x, m):
    return ((x + m - 1) // m) * m


def _mlp_fused_kernel(x_ref, w_ref, b_ref, o_ref, *, num_hidden):
    """x_ref: [tm, P], w_ref: [L, P, P] (in x out), b_ref: [L, 1, P], o_ref: [tm, P]."""
    h = x_ref[...]
    n_layers = num_hidden + 1
    # Static Python loop -> fully unrolled; activation `h` never leaves the chip.
    for li in range(n_layers):
        h = jnp.dot(
            h, w_ref[li],
            preferred_element_type=jnp.float32,
            precision=jax.lax.Precision.HIGHEST,
        )
        h = h + b_ref[li]                      # broadcast bias over rows
        if li < num_hidden:
            h = jnp.maximum(h, 0.0)            # ReLU (the module's `activation`)
    o_ref[...] = h.astype(o_ref.dtype)


def init_params(key, input_dim, hidden_dim, output_dim, num_layers,
                initialization="He"):
    """PyTorch-layout params ([out, in] weights), mirroring the module's init."""
    dims = [input_dim] + [hidden_dim] * num_layers + [output_dim]
    params = []
    for li in range(num_layers + 1):
        fan_in, fan_out = dims[li], dims[li + 1]
        key, kw, kb = jax.random.split(key, 3)
        if initialization == "He":
            # kaiming_uniform_ (a=0): bound = sqrt(2) * sqrt(3 / fan_in)
            bound = (2.0 ** 0.5) * (3.0 / fan_in) ** 0.5
        elif initialization == "Xavier":
            bound = (6.0 / (fan_in + fan_out)) ** 0.5
        else:
            bound = (1.0 / fan_in) ** 0.5
        w = jax.random.uniform(kw, (fan_out, fan_in), jnp.float32, -bound, bound)
        # bias keeps PyTorch default Linear init: U(-1/sqrt(fan_in), 1/sqrt(fan_in))
        b_bound = (1.0 / fan_in) ** 0.5
        b = jax.random.uniform(kb, (fan_out,), jnp.float32, -b_bound, b_bound)
        params.append((w, b))
    return params


def pack_params(params):
    """One-time transpose + zero-pad + stack into kernel-native layout.

    Returns (ws_packed [L, P, P] as [in, out], bs_packed [L, 1, P], P).
    """
    all_dims = [params[0][0].shape[1]] + [w.shape[0] for w, _ in params]
    P = _round_up(max(all_dims), LANE)
    ws, bs = [], []
    for w, b in params:
        n_out, n_in = w.shape
        w_pad = jnp.zeros((P, P), jnp.float32).at[:n_in, :n_out].set(w.T)
        b_pad = jnp.zeros((1, P), jnp.float32).at[0, :n_out].set(b)
        ws.append(w_pad)
        bs.append(b_pad)
    return jnp.stack(ws), jnp.stack(bs), P


def mlp_forward_pallas(x, ws_packed, bs_packed, output_dim, *, num_hidden,
                       tm=256):
    """x: [M, input_dim] f32 -> [M, output_dim] f32 via one fused Pallas kernel."""
    M, K = x.shape
    L, P, _ = ws_packed.shape
    M_pad = _round_up(M, SUBLANE)
    tm = min(tm, M_pad)
    M_pad = _round_up(M_pad, tm)          # grid divides evenly
    x_pad = jnp.zeros((M_pad, P), jnp.float32).at[:M, :K].set(x)

    kernel = functools.partial(_mlp_fused_kernel, num_hidden=num_hidden)
    out_pad = pl.pallas_call(
        kernel,
        out_shape=jax.ShapeDtypeStruct((M_pad, P), jnp.float32),
        grid=(M_pad // tm,),
        in_specs=[
            pl.BlockSpec((tm, P), lambda i: (i, 0)),        # activation tile
            pl.BlockSpec((L, P, P), lambda i: (0, 0, 0)),   # all weights, resident
            pl.BlockSpec((L, 1, P), lambda i: (0, 0, 0)),   # all biases, resident
        ],
        out_specs=pl.BlockSpec((tm, P), lambda i: (i, 0)),
        compiler_params=pltpu.CompilerParams(
            dimension_semantics=("parallel",)),              # megacore on v7x
    )(x_pad, ws_packed, bs_packed)
    return out_pad[:M, :output_dim]


if __name__ == "__main__":
    # Small shapes consistent with the module's forward.
    batch, input_dim, hidden_dim, output_dim, num_layers = 8, 32, 64, 16, 3

    key = jax.random.PRNGKey(0)
    key, kx = jax.random.split(key)
    x = jax.random.normal(kx, (batch, input_dim), jnp.float32)

    params = init_params(key, input_dim, hidden_dim, output_dim, num_layers,
                         initialization="He")
    ws_packed, bs_packed, _ = pack_params(params)   # one-time layout prep

    out = mlp_forward_pallas(x, ws_packed, bs_packed, output_dim,
                             num_hidden=num_layers)
    jax.block_until_ready(out)

    # Pure-JAX reference with the same (unpadded, PyTorch-layout) params.
    hi = jax.lax.Precision.HIGHEST
    ref = x
    for w, b in params[:-1]:
        ref = jnp.maximum(jnp.dot(ref, w.T, precision=hi) + b, 0.0)
    ref = jnp.dot(ref, params[-1][0].T, precision=hi) + params[-1][1]

    assert out.shape == (batch, output_dim)
    assert jnp.allclose(out, ref, atol=1e-4, rtol=1e-4), (
        float(jnp.max(jnp.abs(out - ref))))

    print("KERNEL_OK")
</pallas_src>

<mosaic_0001>
module attributes {stable_mosaic.version = 11 : i64} {
  func.func @_mlp_fused_kernel(%arg0: i32, %arg1: memref<8x128xf32, #tpu.memory_space<vmem>>, %arg2: memref<4x128x128xf32, #tpu.memory_space<vmem>>, %arg3: memref<4x1x128xf32, #tpu.memory_space<vmem>>, %arg4: memref<8x128xf32, #tpu.memory_space<vmem>>) attributes {dimension_semantics = [#tpu.dimension_semantics<parallel>], iteration_bounds = array<i64: 1>, scalar_prefetch = 0 : i64, scratch_operands = 0 : i64, tpu.core_type = #tpu.core_type<tc>, window_params = [{transform_indices = @transform_0, window_bounds = array<i64: 8, 128>}, {pipeline_mode = #tpu.pipeline_mode<synchronous>, transform_indices = @transform_1, window_bounds = array<i64: 4, 128, 128>}, {pipeline_mode = #tpu.pipeline_mode<synchronous>, transform_indices = @transform_2, window_bounds = array<i64: 4, 1, 128>}, {transform_indices = @transform_3, window_bounds = array<i64: 8, 128>}]} {
    %c0 = arith.constant 0 : index
    %c0_0 = arith.constant 0 : index
    %0 = vector.load %arg1[%c0, %c0_0] : memref<8x128xf32, #tpu.memory_space<vmem>>, vector<8x128xf32>
    %c0_1 = arith.constant 0 : index
    %c0_2 = arith.constant 0 : index
    %c0_3 = arith.constant 0 : index
    %1 = vector.load %arg2[%c0_1, %c0_2, %c0_3] : memref<4x128x128xf32, #tpu.memory_space<vmem>>, vector<1x128x128xf32>
    %2 = vector.shape_cast %1 : vector<1x128x128xf32> to vector<128x128xf32>
    %cst = arith.constant dense<0.000000e+00> : vector<8x128xf32>
    %3 = tpu.matmul %0, %2, %cst {dimension_numbers = #tpu.dot_dimension_numbers<[1], [0], [0], [1], [0, 0, 1, 1], [], []>, precision = #tpu.contract_precision<fp32>} : vector<8x128xf32>, vector<128x128xf32>, vector<8x128xf32> -> vector<8x128xf32>
    %c0_4 = arith.constant 0 : index
    %c0_5 = arith.constant 0 : index
    %c0_6 = arith.constant 0 : index
    %4 = vector.load %arg3[%c0_4, %c0_5, %c0_6] : memref<4x1x128xf32, #tpu.memory_space<vmem>>, vector<1x1x128xf32>
    %5 = vector.shape_cast %4 : vector<1x1x128xf32> to vector<1x128xf32>
    %6 = vector.broadcast %5 : vector<1x128xf32> to vector<8x128xf32>
    %7 = arith.addf %3, %6 : vector<8x128xf32>
    %cst_7 = arith.constant 0.000000e+00 : f32
    %8 = vector.broadcast %cst_7 : f32 to vector<8x128xf32>
    %9 = arith.maximumf %7, %8 : vector<8x128xf32>
    %c1 = arith.constant 1 : index
    %c0_8 = arith.constant 0 : index
    %c0_9 = arith.constant 0 : index
    %10 = vector.load %arg2[%c1, %c0_8, %c0_9] : memref<4x128x128xf32, #tpu.memory_space<vmem>>, vector<1x128x128xf32>
    %11 = vector.shape_cast %10 : vector<1x128x128xf32> to vector<128x128xf32>
    %cst_10 = arith.constant dense<0.000000e+00> : vector<8x128xf32>
    %12 = tpu.matmul %9, %11, %cst_10 {dimension_numbers = #tpu.dot_dimension_numbers<[1], [0], [0], [1], [0, 0, 1, 1], [], []>, precision = #tpu.contract_precision<fp32>} : vector<8x128xf32>, vector<128x128xf32>, vector<8x128xf32> -> vector<8x128xf32>
    %c1_11 = arith.constant 1 : index
    %c0_12 = arith.constant 0 : index
    %c0_13 = arith.constant 0 : index
    %13 = vector.load %arg3[%c1_11, %c0_12, %c0_13] : memref<4x1x128xf32, #tpu.memory_space<vmem>>, vector<1x1x128xf32>
    %14 = vector.shape_cast %13 : vector<1x1x128xf32> to vector<1x128xf32>
    %15 = vector.broadcast %14 : vector<1x128xf32> to vector<8x128xf32>
    %16 = arith.addf %12, %15 : vector<8x128xf32>
    %cst_14 = arith.constant 0.000000e+00 : f32
    %17 = vector.broadcast %cst_14 : f32 to vector<8x128xf32>
    %18 = arith.maximumf %16, %17 : vector<8x128xf32>
    %c2 = arith.constant 2 : index
    %c0_15 = arith.constant 0 : index
    %c0_16 = arith.constant 0 : index
    %19 = vector.load %arg2[%c2, %c0_15, %c0_16] : memref<4x128x128xf32, #tpu.memory_space<vmem>>, vector<1x128x128xf32>
    %20 = vector.shape_cast %19 : vector<1x128x128xf32> to vector<128x128xf32>
    %cst_17 = arith.constant dense<0.000000e+00> : vector<8x128xf32>
    %21 = tpu.matmul %18, %20, %cst_17 {dimension_numbers = #tpu.dot_dimension_numbers<[1], [0], [0], [1], [0, 0, 1, 1], [], []>, precision = #tpu.contract_precision<fp32>} : vector<8x128xf32>, vector<128x128xf32>, vector<8x128xf32> -> vector<8x128xf32>
    %c2_18 = arith.constant 2 : index
    %c0_19 = arith.constant 0 : index
    %c0_20 = arith.constant 0 : index
    %22 = vector.load %arg3[%c2_18, %c0_19, %c0_20] : memref<4x1x128xf32, #tpu.memory_space<vmem>>, vector<1x1x128xf32>
    %23 = vector.shape_cast %22 : vector<1x1x128xf32> to vector<1x128xf32>
    %24 = vector.broadcast %23 : vector<1x128xf32> to vector<8x128xf32>
    %25 = arith.addf %21, %24 : vector<8x128xf32>
    %cst_21 = arith.constant 0.000000e+00 : f32
    %26 = vector.broadcast %cst_21 : f32 to vector<8x128xf32>
    %27 = arith.maximumf %25, %26 : vector<8x128xf32>
    %c3 = arith.constant 3 : index
    %c0_22 = arith.constant 0 : index
    %c0_23 = arith.constant 0 : index
    %28 = vector.load %arg2[%c3, %c0_22, %c0_23] : memref<4x128x128xf32, #tpu.memory_space<vmem>>, vector<1x128x128xf32>
    %29 = vector.shape_cast %28 : vector<1x128x128xf32> to vector<128x128xf32>
    %cst_24 = arith.constant dense<0.000000e+00> : vector<8x128xf32>
    %30 = tpu.matmul %27, %29, %cst_24 {dimension_numbers = #tpu.dot_dimension_numbers<[1], [0], [0], [1], [0, 0, 1, 1], [], []>, precision = #tpu.contract_precision<fp32>} : vector<8x128xf32>, vector<128x128xf32>, vector<8x128xf32> -> vector<8x128xf32>
    %c3_25 = arith.constant 3 : index
    %c0_26 = arith.constant 0 : index
    %c0_27 = arith.constant 0 : index
    %31 = vector.load %arg3[%c3_25, %c0_26, %c0_27] : memref<4x1x128xf32, #tpu.memory_space<vmem>>, vector<1x1x128xf32>
    %32 = vector.shape_cast %31 : vector<1x1x128xf32> to vector<1x128xf32>
    %33 = vector.broadcast %32 : vector<1x128xf32> to vector<8x128xf32>
    %34 = arith.addf %30, %33 : vector<8x128xf32>
    %c0_28 = arith.constant 0 : index
    %c0_29 = arith.constant 0 : index
    %35 = vector.load %arg4[%c0_28, %c0_29] : memref<8x128xf32, #tpu.memory_space<vmem>>, vector<8x128xf32>
    tpu.vector_store %arg4[%c0_28, %c0_29], %34 {strides = array<i32>} : memref<8x128xf32, #tpu.memory_space<vmem>>, vector<8x128xf32>,
    return
  }
  func.func @transform_0(%arg0: i32) -> (i32, i32) {
    %c0_i32 = arith.constant 0 : i32
    %c0_i32_0 = arith.constant 0 : i32
    return %arg0, %c0_i32 : i32, i32
  }
  func.func @transform_1(%arg0: i32) -> (i32, i32, i32) {
    %c0_i32 = arith.constant 0 : i32
    %c0_i32_0 = arith.constant 0 : i32
    %c0_i32_1 = arith.constant 0 : i32
    %c0_i32_2 = arith.constant 0 : i32
    return %c0_i32, %c0_i32_0, %c0_i32_1 : i32, i32, i32
  }
  func.func @transform_2(%arg0: i32) -> (i32, i32, i32) {
    %c0_i32 = arith.constant 0 : i32
    %c0_i32_0 = arith.constant 0 : i32
    %c0_i32_1 = arith.constant 0 : i32
    %c0_i32_2 = arith.constant 0 : i32
    return %c0_i32, %c0_i32_0, %c0_i32_1 : i32, i32, i32
  }
  func.func @transform_3(%arg0: i32) -> (i32, i32) {
    %c0_i32 = arith.constant 0 : i32
    %c0_i32_0 = arith.constant 0 : i32
    return %arg0, %c0_i32 : i32, i32
  }
}

</mosaic_0001>

<llo_original>
// kernel: tpu_custom_call.1
$region0: #{tpu_custom_call.1}
  #allocation0 [shape = 'u32[]', space=smem, size = 0x4, offset = 0x4, fixed_abs, tag = 'smem constant byte address 0x4 - core index']
  #allocation1 [shape = 'u32[72,128]{1,0:T(1,128)}', space=vmem, size = 0x9000, scoped, tag = 'internal scratch']
  %s0 = inlined_call_operand.hbm [shape: f32[8,128], index: 0, kind: input, shape index: {}]
  %s1 = inlined_call_operand.hbm [shape: f32[4,128,128], index: 1, kind: input, shape index: {}]
  %s2 = inlined_call_operand.hbm [shape: f32[4,1,128], index: 2, kind: input, shape index: {}]
  %s3 = inlined_call_operand.hbm [shape: f32[8,128], index: 3, kind: output, shape index: {}]
  %s4 = sld [smem:[#allocation0]]
  $region34: #{tpu_custom_call.1} parent=0
    _
  %s6 = ssub.s32 1, %s4
  %s7 = scalar_select 0, %s6, %s4
  $region1: #{tpu_custom_call.1} parent=0
    #allocation2 [shape = 'u8[4096]{0}', space=vmem, size = 0x1000, scoped, tag = 'input window, operand 0, single buffered']
    #allocation3 [shape = 's32[1]{0}', space=sflag, size = 0x4, scoped, tag = 'scoped memory for tpu_custom_call.1']
    #allocation4 [shape = 's32[1]{0}', space=sflag, size = 0x4, scoped, tag = 'scoped memory for tpu_custom_call.1']
    #allocation5 [shape = 'u8[262144]{0}', space=vmem, size = 0x40000, scoped, tag = 'input window, operand 1, single buffered']
    #allocation6 [shape = 's32[1]{0}', space=sflag, size = 0x4, scoped, tag = 'scoped memory for tpu_custom_call.1']
    #allocation7 [shape = 'u8[2048]{0}', space=vmem, size = 0x800, scoped, tag = 'input window, operand 2, single buffered']
    #allocation8 [shape = 'u8[4096]{0}', space=vmem, size = 0x1000, scoped, tag = 'output window, operand 0, single buffered']
    %8 = vsyncpa [#allocation3], 0
    %9 = vsyncpa [#allocation6], 0
    %10 = vsyncpa [#allocation4], 0
    // Predicated region
    $region2: #{tpu_custom_call.1} parent=1 // pred_check
      _
    $region3: #{tpu_custom_call.1} parent=1 // pred_check_branch
      %12 = sbr.rel (0) target = $region5
    $region4: #{tpu_custom_call.1} parent=1 // pred_region
      %14 = vsyncadd [#allocation3], 0
      %s16 = sshll.u32 %s0, 4
      %s17 = int_to_ptr.hbm [resolvable:$true] %s16
      %s18 = sshll.u32 [#allocation2], 4
      %s19 = int_to_ptr.vmem [resolvable:$true] %s18
      %21 = dma.hbm_to_vmem [thread:$0]  %s17, 128, %s19, [#allocation3]
    $region5: #{tpu_custom_call.1} parent=1 // pred_fallthru
      _
    // Predicated region
    $region6: #{tpu_custom_call.1} parent=1 // pred_check
      _
    $region7: #{tpu_custom_call.1} parent=1 // pred_check_branch
      %23 = sbr.rel (0) target = $region9
    $region8: #{tpu_custom_call.1} parent=1 // pred_region
      %25 = vsyncadd [#allocation6], 0
      %s26 = sshll.u32 %s1, 4
      %s27 = int_to_ptr.hbm [resolvable:$true] %s26
      %s28 = sshll.u32 [#allocation5], 4
      %s29 = int_to_ptr.vmem [resolvable:$true] %s28
      %34 = dma.hbm_to_vmem [thread:$0]  %s27, 8192, %s29, [#allocation6], 128, 128, 8
    $region9: #{tpu_custom_call.1} parent=1 // pred_fallthru
      _
    // Predicated region
    $region10: #{tpu_custom_call.1} parent=1 // pred_check
      _
    $region11: #{tpu_custom_call.1} parent=1 // pred_check_branch
      %36 = sbr.rel (0) target = $region13
    $region12: #{tpu_custom_call.1} parent=1 // pred_region
      %38 = vsyncadd [#allocation6], 0
      %s39 = sshll.u32 %s2, 4
      %s40 = int_to_ptr.hbm [resolvable:$true] %s39
      %s41 = sshll.u32 [#allocation7], 4
      %s42 = int_to_ptr.vmem [resolvable:$true] %s41
      %47 = dma.hbm_to_vmem [thread:$0]  %s40, 64, %s42, [#allocation6], 16, 16, 1
    $region13: #{tpu_custom_call.1} parent=1 // pred_fallthru
      _
    // Predicated region
    $region14: #{tpu_custom_call.1} parent=1 // pred_check
      _
    $region15: #{tpu_custom_call.1} parent=1 // pred_check_branch
      %49 = sbr.rel (0) target = $region17
    $region16: #{tpu_custom_call.1} parent=1 // pred_region
      %51 = dma.done [#allocation3], 128
    $region17: #{tpu_custom_call.1} parent=1 // pred_fallthru
      _
    // Predicated region
    $region18: #{tpu_custom_call.1} parent=1 // pred_check
      _
    $region19: #{tpu_custom_call.1} parent=1 // pred_check_branch
      %53 = sbr.rel (0) target = $region21
    $region20: #{tpu_custom_call.1} parent=1 // pred_region
      %55 = dma.done [#allocation6], 8192
    $region21: #{tpu_custom_call.1} parent=1 // pred_fallthru
      _
    // Predicated region
    $region22: #{tpu_custom_call.1} parent=1 // pred_check
      _
    $region23: #{tpu_custom_call.1} parent=1 // pred_check_branch
      %57 = sbr.rel (0) target = $region25
    $region24: #{tpu_custom_call.1} parent=1 // pred_region
      %59 = dma.done [#allocation6], 64
    $region25: #{tpu_custom_call.1} parent=1 // pred_fallthru
      _
    %v60 = vld [vmem:[#allocation2] sm:$0xff]
    %v61 = vld [vmem:[#allocation5] sm:$0xff]
    %v62 = vld [vmem:[#allocation5 + $0x8] sm:$0xff]
    %v63 = vld [vmem:[#allocation5 + $0x10] sm:$0xff]
    %v64 = vld [vmem:[#allocation5 + $0x18] sm:$0xff]
    %v65 = vld [vmem:[#allocation5 + $0x20] sm:$0xff]
    %v66 = vld [vmem:[#allocation5 + $0x28] sm:$0xff]
    %v67 = vld [vmem:[#allocation5 + $0x30] sm:$0xff]
    %v68 = vld [vmem:[#allocation5 + $0x38] sm:$0xff]
    %v69 = vld [vmem:[#allocation5 + $0x40] sm:$0xff]
    %v70 = vld [vmem:[#allocation5 + $0x48] sm:$0xff]
    %v71 = vld [vmem:[#allocation5 + $0x50] sm:$0xff]
    %v72 = vld [vmem:[#allocation5 + $0x58] sm:$0xff]
    %v73 = vld [vmem:[#allocation5 + $0x60] sm:$0xff]
    %v74 = vld [vmem:[#allocation5 + $0x68] sm:$0xff]
    %v75 = vld [vmem:[#allocation5 + $0x70] sm:$0xff]
    %v76 = vld [vmem:[#allocation5 + $0x78] sm:$0xff]
    %v77 = vld [vmem:[#allocation7] sm:$0x1]
    %v79 = vperm.slane %v77, 0
    %v81 = vand.u32 %v76, 4294901760
    %82 = vmatpush.msra.mxu0 %v81
    %v83 = vand.u32 %v75, 4294901760
    %84 = vmatpush.msra.mxu0 %v83
    %v85 = vand.u32 %v74, 4294901760
    %86 = vmatpush.msra.mxu0 %v85
    %v87 = vand.u32 %v73, 4294901760
    %88 = vmatpush.msra.mxu0 %v87
    %v89 = vand.u32 %v72, 4294901760
    %90 = vmatpush.msra.mxu0 %v89
    %v91 = vand.u32 %v71, 4294901760
    %92 = vmatpush.msra.mxu0 %v91
    %v93 = vand.u32 %v70, 4294901760
    %94 = vmatpush.msra.mxu0 %v93
    %v95 = vand.u32 %v69, 4294901760
    %96 = vmatpush.msra.mxu0 %v95
    %v97 = vand.u32 %v68, 4294901760
    %98 = vmatpush.msra.mxu0 %v97
    %v99 = vand.u32 %v67, 4294901760
    %100 = vmatpush.msra.mxu0 %v99
    %v101 = vand.u32 %v66, 4294901760
    %102 = vmatpush.msra.mxu0 %v101
    %v103 = vand.u32 %v65, 4294901760
    %104 = vmatpush.msra.mxu0 %v103
    %v105 = vand.u32 %v64, 4294901760
    %106 = vmatpush.msra.mxu0 %v105
    %v107 = vand.u32 %v63, 4294901760
    %108 = vmatpush.msra.mxu0 %v107
    %v109 = vand.u32 %v62, 4294901760
    %110 = vmatpush.msra.mxu0 %v109
    %v111 = vand.u32 %v61, 4294901760
    %112 = vmatpush.msra.mxu0 %v111
    %v113 = vand.u32 %v60, 4294901760
    %v114 = vsub.f32 %v60, %v113
    %v115 = vand.u32 %v114, 4294901760
    %v116 = vsub.f32 %v114, %v115
    %v117 = vand.u32 %v116, 4294901760
    %118 = vmatmul.f32.gmra.mxu0 %v117
    %v119 = vpop.f32.mrf.mxu0
    %v120 = vadd.f32 %v79, %v119
    %121 = vdwg.mxu0
    %v122 = vand.u32 %v76, 4294901760
    %v123 = vsub.f32 %v76, %v122
    %v124 = vand.u32 %v123, 4294901760
    %v125 = vsub.f32 %v123, %v124
    %v126 = vand.u32 %v125, 4294901760
    %127 = vmatpush.msra.mxu0 %v126
    %v128 = vand.u32 %v75, 4294901760
    %v129 = vsub.f32 %v75, %v128
    %v130 = vand.u32 %v129, 4294901760
    %v131 = vsub.f32 %v129, %v130
    %v132 = vand.u32 %v131, 4294901760
    %133 = vmatpush.msra.mxu0 %v132
    %v134 = vand.u32 %v74, 4294901760
    %v135 = vsub.f32 %v74, %v134
    %v136 = vand.u32 %v135, 4294901760
    %v137 = vsub.f32 %v135, %v136
    %v138 = vand.u32 %v137, 4294901760
    %139 = vmatpush.msra.mxu0 %v138
    %v140 = vand.u32 %v73, 4294901760
    %v141 = vsub.f32 %v73, %v140
    %v142 = vand.u32 %v141, 4294901760
    %v143 = vsub.f32 %v141, %v142
    %v144 = vand.u32 %v143, 4294901760
    %145 = vmatpush.msra.mxu0 %v144
    %v146 = vand.u32 %v72, 4294901760
    %v147 = vsub.f32 %v72, %v146
    %v148 = vand.u32 %v147, 4294901760
    %v149 = vsub.f32 %v147, %v148
    %v150 = vand.u32 %v149, 4294901760
    %151 = vmatpush.msra.mxu0 %v150
    %v152 = vand.u32 %v71, 4294901760
    %v153 = vsub.f32 %v71, %v152
    %v154 = vand.u32 %v153, 4294901760
    %v155 = vsub.f32 %v153, %v154
    %v156 = vand.u32 %v155, 4294901760
    %157 = vmatpush.msra.mxu0 %v156
    %v158 = vand.u32 %v70, 4294901760
    %v159 = vsub.f32 %v70, %v158
    %v160 = vand.u32 %v159, 4294901760
    %v161 = vsub.f32 %v159, %v160
    %v162 = vand.u32 %v161, 4294901760
    %163 = vmatpush.msra.mxu0 %v162
    %v164 = vand.u32 %v69, 4294901760
    %v165 = vsub.f32 %v69, %v164
    %v166 = vand.u32 %v165, 4294901760
    %v167 = vsub.f32 %v165, %v166
    %v168 = vand.u32 %v167, 4294901760
    %169 = vmatpush.msra.mxu0 %v168
    %v170 = vand.u32 %v68, 4294901760
    %v171 = vsub.f32 %v68, %v170
    %v172 = vand.u32 %v171, 4294901760
    %v173 = vsub.f32 %v171, %v172
    %v174 = vand.u32 %v173, 4294901760
    %175 = vmatpush.msra.mxu0 %v174
    %v176 = vand.u32 %v67, 4294901760
    %v177 = vsub.f32 %v67, %v176
    %v178 = vand.u32 %v177, 4294901760
    %v179 = vsub.f32 %v177, %v178
    %v180 = vand.u32 %v179, 4294901760
    %181 = vmatpush.msra.mxu0 %v180
    %v182 = vand.u32 %v66, 4294901760
    %v183 = vsub.f32 %v66, %v182
    %v184 = vand.u32 %v183, 4294901760
    %v185 = vsub.f32 %v183, %v184
    %v186 = vand.u32 %v185, 4294901760
    %187 = vmatpush.msra.mxu0 %v186
    %v188 = vand.u32 %v65, 4294901760
    %v189 = vsub.f32 %v65, %v188
    %v190 = vand.u32 %v189, 4294901760
    %v191 = vsub.f32 %v189, %v190
    %v192 = vand.u32 %v191, 4294901760
    %193 = vmatpush.msra.mxu0 %v192
    %v194 = vand.u32 %v64, 4294901760
    %v195 = vsub.f32 %v64, %v194
    %v196 = vand.u32 %v195, 4294901760
    %v197 = vsub.f32 %v195, %v196
    %v198 = vand.u32 %v197, 4294901760
    %199 = vmatpush.msra.mxu0 %v198
    %v200 = vand.u32 %v63, 4294901760
    %v201 = vsub.f32 %v63, %v200
    %v202 = vand.u32 %v201, 4294901760
    %v203 = vsub.f32 %v201, %v202
    %v204 = vand.u32 %v203, 4294901760
    %205 = vmatpush.msra.mxu0 %v204
    %v206 = vand.u32 %v62, 4294901760
    %v207 = vsub.f32 %v62, %v206
    %v208 = vand.u32 %v207, 4294901760
    %v209 = vsub.f32 %v207, %v208
    %v210 = vand.u32 %v209, 4294901760
    %211 = vmatpush.msra.mxu0 %v210
    %v212 = vand.u32 %v61, 4294901760
    %v213 = vsub.f32 %v61, %v212
    %v214 = vand.u32 %v213, 4294901760
    %v215 = vsub.f32 %v213, %v214
    %v216 = vand.u32 %v215, 4294901760
    %217 = vmatpush.msra.mxu0 %v216
    %v218 = vand.u32 %v60, 4294901760
    %219 = vmatmul.f32.gmra.mxu0 %v218
    %v220 = vpop.f32.mrf.mxu0
    %v221 = vadd.f32 %v120, %v220
    %222 = vdwg.mxu0
    %v223 = vand.u32 %v76, 4294901760
    %v224 = vsub.f32 %v76, %v223
    %225 = vmatpush.msra.mxu0 %v224
    %v226 = vand.u32 %v75, 4294901760
    %v227 = vsub.f32 %v75, %v226
    %228 = vmatpush.msra.mxu0 %v227
    %v229 = vand.u32 %v74, 4294901760
    %v230 = vsub.f32 %v74, %v229
    %231 = vmatpush.msra.mxu0 %v230
    %v232 = vand.u32 %v73, 4294901760
    %v233 = vsub.f32 %v73, %v232
    %234 = vmatpush.msra.mxu0 %v233
    %v235 = vand.u32 %v72, 4294901760
    %v236 = vsub.f32 %v72, %v235
    %237 = vmatpush.msra.mxu0 %v236
    %v238 = vand.u32 %v71, 4294901760
    %v239 = vsub.f32 %v71, %v238
    %240 = vmatpush.msra.mxu0 %v239
    %v241 = vand.u32 %v70, 4294901760
    %v242 = vsub.f32 %v70, %v241
    %243 = vmatpush.msra.mxu0 %v242
    %v244 = vand.u32 %v69, 4294901760
    %v245 = vsub.f32 %v69, %v244
    %246 = vmatpush.msra.mxu0 %v245
    %v247 = vand.u32 %v68, 4294901760
    %v248 = vsub.f32 %v68, %v247
    %249 = vmatpush.msra.mxu0 %v248
    %v250 = vand.u32 %v67, 4294901760
    %v251 = vsub.f32 %v67, %v250
    %252 = vmatpush.msra.mxu0 %v251
    %v253 = vand.u32 %v66, 4294901760
    %v254 = vsub.f32 %v66, %v253
    %255 = vmatpush.msra.mxu0 %v254
    %v256 = vand.u32 %v65, 4294901760
    %v257 = vsub.f32 %v65, %v256
    %258 = vmatpush.msra.mxu0 %v257
    %v259 = vand.u32 %v64, 4294901760
    %v260 = vsub.f32 %v64, %v259
    %261 = vmatpush.msra.mxu0 %v260
    %v262 = vand.u32 %v63, 4294901760
    %v263 = vsub.f32 %v63, %v262
    %264 = vmatpush.msra.mxu0 %v263
    %v265 = vand.u32 %v62, 4294901760
    %v266 = vsub.f32 %v62, %v265
    %267 = vmatpush.msra.mxu0 %v266
    %v268 = vand.u32 %v61, 4294901760
    %v269 = vsub.f32 %v61, %v268
    %270 = vmatpush.msra.mxu0 %v269
    %v271 = vand.u32 %v60, 4294901760
    %v272 = vsub.f32 %v60, %v271
    %273 = vmatmul.f32.gmra.mxu0 %v272
    %v274 = vpop.f32.mrf.mxu0
    %v275 = vadd.f32 %v221, %v274
    %276 = vdwg.mxu0
    %v277 = vand.u32 %v76, 4294901760
    %278 = vmatpush.msra.mxu0 %v277
    %v279 = vand.u32 %v75, 4294901760
    %280 = vmatpush.msra.mxu0 %v279
    %v281 = vand.u32 %v74, 4294901760
    %282 = vmatpush.msra.mxu0 %v281
    %v283 = vand.u32 %v73, 4294901760
    %284 = vmatpush.msra.mxu0 %v283
    %v285 = vand.u32 %v72, 4294901760
    %286 = vmatpush.msra.mxu0 %v285
    %v287 = vand.u32 %v71, 4294901760
    %288 = vmatpush.msra.mxu0 %v287
    %v289 = vand.u32 %v70, 4294901760
    %290 = vmatpush.msra.mxu0 %v289
    %v291 = vand.u32 %v69, 4294901760
    %292 = vmatpush.msra.mxu0 %v291
    %v293 = vand.u32 %v68, 4294901760
    %294 = vmatpush.msra.mxu0 %v293
    %v295 = vand.u32 %v67, 4294901760
    %296 = vmatpush.msra.mxu0 %v295
    %v297 = vand.u32 %v66, 4294901760
    %298 = vmatpush.msra.mxu0 %v297
    %v299 = vand.u32 %v65, 4294901760
    %300 = vmatpush.msra.mxu0 %v299
    %v301 = vand.u32 %v64, 4294901760
    %302 = vmatpush.msra.mxu0 %v301
    %v303 = vand.u32 %v63, 4294901760
    %304 = vmatpush.msra.mxu0 %v303
    %v305 = vand.u32 %v62, 4294901760
    %306 = vmatpush.msra.mxu0 %v305
    %v307 = vand.u32 %v61, 4294901760
    %308 = vmatpush.msra.mxu0 %v307
    %v309 = vand.u32 %v60, 4294901760
    %v310 = vsub.f32 %v60, %v309
    %v311 = vand.u32 %v310, 4294901760
    %312 = vmatmul.f32.gmra.mxu0 %v311
    %v313 = vpop.f32.mrf.mxu0
    %v314 = vadd.f32 %v275, %v313
    %315 = vdwg.mxu0
    %v316 = vand.u32 %v76, 4294901760
    %v317 = vsub.f32 %v76, %v316
    %v318 = vand.u32 %v317, 4294901760
    %319 = vmatpush.msra.mxu0 %v318
    %v320 = vand.u32 %v75, 4294901760
    %v321 = vsub.f32 %v75, %v320
    %v322 = vand.u32 %v321, 4294901760
    %323 = vmatpush.msra.mxu0 %v322
    %v324 = vand.u32 %v74, 4294901760
    %v325 = vsub.f32 %v74, %v324
    %v326 = vand.u32 %v325, 4294901760
    %327 = vmatpush.msra.mxu0 %v326
    %v328 = vand.u32 %v73, 4294901760
    %v329 = vsub.f32 %v73, %v328
    %v330 = vand.u32 %v329, 4294901760
    %331 = vmatpush.msra.mxu0 %v330
    %v332 = vand.u32 %v72, 4294901760
    %v333 = vsub.f32 %v72, %v332
    %v334 = vand.u32 %v333, 4294901760
    %335 = vmatpush.msra.mxu0 %v334
    %v336 = vand.u32 %v71, 4294901760
    %v337 = vsub.f32 %v71, %v336
    %v338 = vand.u32 %v337, 4294901760
    %339 = vmatpush.msra.mxu0 %v338
    %v340 = vand.u32 %v70, 4294901760
    %v341 = vsub.f32 %v70, %v340
    %v342 = vand.u32 %v341, 4294901760
    %343 = vmatpush.msra.mxu0 %v342
    %v344 = vand.u32 %v69, 4294901760
    %v345 = vsub.f32 %v69, %v344
    %v346 = vand.u32 %v345, 4294901760
    %347 = vmatpush.msra.mxu0 %v346
    %v348 = vand.u32 %v68, 4294901760
    %v349 = vsub.f32 %v68, %v348
    %v350 = vand.u32 %v349, 4294901760
    %351 = vmatpush.msra.mxu0 %v350
    %v352 = vand.u32 %v67, 4294901760
    %v353 = vsub.f32 %v67, %v352
    %v354 = vand.u32 %v353, 4294901760
    %355 = vmatpush.msra.mxu0 %v354
    %v356 = vand.u32 %v66, 4294901760
    %v357 = vsub.f32 %v66, %v356
    %v358 = vand.u32 %v357, 4294901760
    %359 = vmatpush.msra.mxu0 %v358
    %v360 = vand.u32 %v65, 4294901760
    %v361 = vsub.f32 %v65, %v360
    %v362 = vand.u32 %v361, 4294901760
    %363 = vmatpush.msra.mxu0 %v362
    %v364 = vand.u32 %v64, 4294901760
    %v365 = vsub.f32 %v64, %v364
    %v366 = vand.u32 %v365, 4294901760
    %367 = vmatpush.msra.mxu0 %v366
    %v368 = vand.u32 %v63, 4294901760
    %v369 = vsub.f32 %v63, %v368
    %v370 = vand.u32 %v369, 4294901760
    %371 = vmatpush.msra.mxu0 %v370
    %v372 = vand.u32 %v62, 4294901760
    %v373 = vsub.f32 %v62, %v372
    %v374 = vand.u32 %v373, 4294901760
    %375 = vmatpush.msra.mxu0 %v374
    %v376 = vand.u32 %v61, 4294901760
    %v377 = vsub.f32 %v61, %v376
    %v378 = vand.u32 %v377, 4294901760
    %379 = vmatpush.msra.mxu0 %v378
    %v380 = vand.u32 %v60, 4294901760
    %381 = vmatmul.f32.gmra.mxu0 %v380
    %v382 = vpop.f32.mrf.mxu0
    %v383 = vadd.f32 %v314, %v382
    %384 = vdwg.mxu0
    %v385 = vand.u32 %v76, 4294901760
    %386 = vmatpush.msra.mxu0 %v385
    %v387 = vand.u32 %v75, 4294901760
    %388 = vmatpush.msra.mxu0 %v387
    %v389 = vand.u32 %v74, 4294901760
    %390 = vmatpush.msra.mxu0 %v389
    %v391 = vand.u32 %v73, 4294901760
    %392 = vmatpush.msra.mxu0 %v391
    %v393 = vand.u32 %v72, 4294901760
    %394 = vmatpush.msra.mxu0 %v393
    %v395 = vand.u32 %v71, 4294901760
    %396 = vmatpush.msra.mxu0 %v395
    %v397 = vand.u32 %v70, 4294901760
    %398 = vmatpush.msra.mxu0 %v397
    %v399 = vand.u32 %v69, 4294901760
    %400 = vmatpush.msra.mxu0 %v399
    %v401 = vand.u32 %v68, 4294901760
    %402 = vmatpush.msra.mxu0 %v401
    %v403 = vand.u32 %v67, 4294901760
    %404 = vmatpush.msra.mxu0 %v403
    %v405 = vand.u32 %v66, 4294901760
    %406 = vmatpush.msra.mxu0 %v405
    %v407 = vand.u32 %v65, 4294901760
    %408 = vmatpush.msra.mxu0 %v407
    %v409 = vand.u32 %v64, 4294901760
    %410 = vmatpush.msra.mxu0 %v409
    %v411 = vand.u32 %v63, 4294901760
    %412 = vmatpush.msra.mxu0 %v411
    %v413 = vand.u32 %v62, 4294901760
    %414 = vmatpush.msra.mxu0 %v413
    %v415 = vand.u32 %v61, 4294901760
    %416 = vmatpush.msra.mxu0 %v415
    %v417 = vand.u32 %v60, 4294901760
    %418 = vmatmul.f32.gmra.mxu0 %v417
    %v419 = vpop.f32.mrf.mxu0
    %v420 = vadd.f32 %v383, %v419
    %421 = vdwg.mxu0
    %v422 = vmax.f32 %v420, 0.0
    %s423 = scalar_lea.vmem [#allocation5], 128
    %v424 = vld [vmem:[%s423] sm:$0xff]
    %v425 = vld [vmem:[%s423 + $0x8] sm:$0xff]
    %v426 = vld [vmem:[%s423 + $0x10] sm:$0xff]
    %v427 = vld [vmem:[%s423 + $0x18] sm:$0xff]
    %v428 = vld [vmem:[%s423 + $0x20] sm:$0xff]
    %v429 = vld [vmem:[%s423 + $0x28] sm:$0xff]
    %v430 = vld [vmem:[%s423 + $0x30] sm:$0xff]
    %v431 = vld [vmem:[%s423 + $0x38] sm:$0xff]
    %v432 = vld [vmem:[%s423 + $0x40] sm:$0xff]
    %v433 = vld [vmem:[%s423 + $0x48] sm:$0xff]
    %v434 = vld [vmem:[%s423 + $0x50] sm:$0xff]
    %v435 = vld [vmem:[%s423 + $0x58] sm:$0xff]
    %v436 = vld [vmem:[%s423 + $0x60] sm:$0xff]
    %v437 = vld [vmem:[%s423 + $0x68] sm:$0xff]
    %v438 = vld [vmem:[%s423 + $0x70] sm:$0xff]
    %v439 = vld [vmem:[%s423 + $0x78] sm:$0xff]
    %s440 = scalar_lea.vmem [#allocation7], 1
    %v441 = vld [vmem:[%s440] sm:$0x1]
    %v443 = vperm.slane %v441, 0
    %v445 = vand.u32 %v439, 4294901760
    %446 = vmatpush.msra.mxu0 %v445
    %v447 = vand.u32 %v438, 4294901760
    %448 = vmatpush.msra.mxu0 %v447
    %v449 = vand.u32 %v437, 4294901760
    %450 = vmatpush.msra.mxu0 %v449
    %v451 = vand.u32 %v436, 4294901760
    %452 = vmatpush.msra.mxu0 %v451
    %v453 = vand.u32 %v435, 4294901760
    %454 = vmatpush.msra.mxu0 %v453
    %v455 = vand.u32 %v434, 4294901760
    %456 = vmatpush.msra.mxu0 %v455
    %v457 = vand.u32 %v433, 4294901760
    %458 = vmatpush.msra.mxu0 %v457
    %v459 = vand.u32 %v432, 4294901760
    %460 = vmatpush.msra.mxu0 %v459
    %v461 = vand.u32 %v431, 4294901760
    %462 = vmatpush.msra.mxu0 %v461
    %v463 = vand.u32 %v430, 4294901760
    %464 = vmatpush.msra.mxu0 %v463
    %v465 = vand.u32 %v429, 4294901760
    %466 = vmatpush.msra.mxu0 %v465
    %v467 = vand.u32 %v428, 4294901760
    %468 = vmatpush.msra.mxu0 %v467
    %v469 = vand.u32 %v427, 4294901760
    %470 = vmatpush.msra.mxu0 %v469
    %v471 = vand.u32 %v426, 4294901760
    %472 = vmatpush.msra.mxu0 %v471
    %v473 = vand.u32 %v425, 4294901760
    %474 = vmatpush.msra.mxu0 %v473
    %v475 = vand.u32 %v424, 4294901760
    %476 = vmatpush.msra.mxu0 %v475
    %v477 = vand.u32 %v422, 4294901760
    %v478 = vsub.f32 %v422, %v477
    %v479 = vand.u32 %v478, 4294901760
    %v480 = vsub.f32 %v478, %v479
    %v481 = vand.u32 %v480, 4294901760
    %482 = vmatmul.f32.gmra.mxu0 %v481
    %v483 = vpop.f32.mrf.mxu0
    %v484 = vadd.f32 %v443, %v483
    %485 = vdwg.mxu0
    %v486 = vand.u32 %v439, 4294901760
    %v487 = vsub.f32 %v439, %v486
    %v488 = vand.u32 %v487, 4294901760
    %v489 = vsub.f32 %v487, %v488
    %v490 = vand.u32 %v489, 4294901760
    %491 = vmatpush.msra.mxu0 %v490
    %v492 = vand.u32 %v438, 4294901760
    %v493 = vsub.f32 %v438, %v492
    %v494 = vand.u32 %v493, 4294901760
    %v495 = vsub.f32 %v493, %v494
    %v496 = vand.u32 %v495, 4294901760
    %497 = vmatpush.msra.mxu0 %v496
    %v498 = vand.u32 %v437, 4294901760
    %v499 = vsub.f32 %v437, %v498
    %v500 = vand.u32 %v499, 4294901760
    %v501 = vsub.f32 %v499, %v500
    %v502 = vand.u32 %v501, 4294901760
    %503 = vmatpush.msra.mxu0 %v502
    %v504 = vand.u32 %v436, 4294901760
    %v505 = vsub.f32 %v436, %v504
    %v506 = vand.u32 %v505, 4294901760
    %v507 = vsub.f32 %v505, %v506
    %v508 = vand.u32 %v507, 4294901760
    %509 = vmatpush.msra.mxu0 %v508
    %v510 = vand.u32 %v435, 4294901760
    %v511 = vsub.f32 %v435, %v510
    %v512 = vand.u32 %v511, 4294901760
    %v513 = vsub.f32 %v511, %v512
    %v514 = vand.u32 %v513, 4294901760
    %515 = vmatpush.msra.mxu0 %v514
    %v516 = vand.u32 %v434, 4294901760
    %v517 = vsub.f32 %v434, %v516
    %v518 = vand.u32 %v517, 4294901760
    %v519 = vsub.f32 %v517, %v518
    %v520 = vand.u32 %v519, 4294901760
    %521 = vmatpush.msra.mxu0 %v520
    %v522 = vand.u32 %v433, 4294901760
    %v523 = vsub.f32 %v433, %v522
    %v524 = vand.u32 %v523, 4294901760
    %v525 = vsub.f32 %v523, %v524
    %v526 = vand.u32 %v525, 4294901760
    %527 = vmatpush.msra.mxu0 %v526
    %v528 = vand.u32 %v432, 4294901760
    %v529 = vsub.f32 %v432, %v528
    %v530 = vand.u32 %v529, 4294901760
    %v531 = vsub.f32 %v529, %v530
    %v532 = vand.u32 %v531, 4294901760
    %533 = vmatpush.msra.mxu0 %v532
    %v534 = vand.u32 %v431, 4294901760
    %v535 = vsub.f32 %v431, %v534
    %v536 = vand.u32 %v535, 4294901760
    %v537 = vsub.f32 %v535, %v536
    %v538 = vand.u32 %v537, 4294901760
    %539 = vmatpush.msra.mxu0 %v538
    %v540 = vand.u32 %v430, 4294901760
    %v541 = vsub.f32 %v430, %v540
    %v542 = vand.u32 %v541, 4294901760
    %v543 = vsub.f32 %v541, %v542
    %v544 = vand.u32 %v543, 4294901760
    %545 = vmatpush.msra.mxu0 %v544
    %v546 = vand.u32 %v429, 4294901760
    %v547 = vsub.f32 %v429, %v546
    %v548 = vand.u32 %v547, 4294901760
    %v549 = vsub.f32 %v547, %v548
    %v550 = vand.u32 %v549, 4294901760
    %551 = vmatpush.msra.mxu0 %v550
    %v552 = vand.u32 %v428, 4294901760
    %v553 = vsub.f32 %v428, %v552
    %v554 = vand.u32 %v553, 4294901760
    %v555 = vsub.f32 %v553, %v554
    %v556 = vand.u32 %v555, 4294901760
    %557 = vmatpush.msra.mxu0 %v556
    %v558 = vand.u32 %v427, 4294901760
    %v559 = vsub.f32 %v427, %v558
    %v560 = vand.u32 %v559, 4294901760
    %v561 = vsub.f32 %v559, %v560
    %v562 = vand.u32 %v561, 4294901760
    %563 = vmatpush.msra.mxu0 %v562
    %v564 = vand.u32 %v426, 4294901760
    %v565 = vsub.f32 %v426, %v564
    %v566 = vand.u32 %v565, 4294901760
    %v567 = vsub.f32 %v565, %v566
    %v568 = vand.u32 %v567, 4294901760
    %569 = vmatpush.msra.mxu0 %v568
    %v570 = vand.u32 %v425, 4294901760
    %v571 = vsub.f32 %v425, %v570
    %v572 = vand.u32 %v571, 4294901760
    %v573 = vsub.f32 %v571, %v572
    %v574 = vand.u32 %v573, 4294901760
    %575 = vmatpush.msra.mxu0 %v574
    %v576 = vand.u32 %v424, 4294901760
    %v577 = vsub.f32 %v424, %v576
    %v578 = vand.u32 %v577, 4294901760
    %v579 = vsub.f32 %v577, %v578
    %v580 = vand.u32 %v579, 4294901760
    %581 = vmatpush.msra.mxu0 %v580
    %v582 = vand.u32 %v422, 4294901760
    %583 = vmatmul.f32.gmra.mxu0 %v582
    %v584 = vpop.f32.mrf.mxu0
    %v585 = vadd.f32 %v484, %v584
    %586 = vdwg.mxu0
    %v587 = vand.u32 %v439, 4294901760
    %v588 = vsub.f32 %v439, %v587
    %589 = vmatpush.msra.mxu0 %v588
    %v590 = vand.u32 %v438, 4294901760
    %v591 = vsub.f32 %v438, %v590
    %592 = vmatpush.msra.mxu0 %v591
    %v593 = vand.u32 %v437, 4294901760
    %v594 = vsub.f32 %v437, %v593
    %595 = vmatpush.msra.mxu0 %v594
    %v596 = vand.u32 %v436, 4294901760
    %v597 = vsub.f32 %v436, %v596
    %598 = vmatpush.msra.mxu0 %v597
    %v599 = vand.u32 %v435, 4294901760
    %v600 = vsub.f32 %v435, %v599
    %601 = vmatpush.msra.mxu0 %v600
    %v602 = vand.u32 %v434, 4294901760
    %v603 = vsub.f32 %v434, %v602
    %604 = vmatpush.msra.mxu0 %v603
    %v605 = vand.u32 %v433, 4294901760
    %v606 = vsub.f32 %v433, %v605
    %607 = vmatpush.msra.mxu0 %v606
    %v608 = vand.u32 %v432, 4294901760
    %v609 = vsub.f32 %v432, %v608
    %610 = vmatpush.msra.mxu0 %v609
    %v611 = vand.u32 %v431, 4294901760
    %v612 = vsub.f32 %v431, %v611
    %613 = vmatpush.msra.mxu0 %v612
    %v614 = vand.u32 %v430, 4294901760
    %v615 = vsub.f32 %v430, %v614
    %616 = vmatpush.msra.mxu0 %v615
    %v617 = vand.u32 %v429, 4294901760
    %v618 = vsub.f32 %v429, %v617
    %619 = vmatpush.msra.mxu0 %v618
    %v620 = vand.u32 %v428, 4294901760
    %v621 = vsub.f32 %v428, %v620
    %622 = vmatpush.msra.mxu0 %v621
    %v623 = vand.u32 %v427, 4294901760
    %v624 = vsub.f32 %v427, %v623
    %625 = vmatpush.msra.mxu0 %v624
    %v626 = vand.u32 %v426, 4294901760
    %v627 = vsub.f32 %v426, %v626
    %628 = vmatpush.msra.mxu0 %v627
    %v629 = vand.u32 %v425, 4294901760
    %v630 = vsub.f32 %v425, %v629
    %631 = vmatpush.msra.mxu0 %v630
    %v632 = vand.u32 %v424, 4294901760
    %v633 = vsub.f32 %v424, %v632
    %634 = vmatpush.msra.mxu0 %v633
    %v635 = vand.u32 %v422, 4294901760
    %v636 = vsub.f32 %v422, %v635
    %637 = vmatmul.f32.gmra.mxu0 %v636
    %v638 = vpop.f32.mrf.mxu0
    %v639 = vadd.f32 %v585, %v638
    %640 = vdwg.mxu0
    %v641 = vand.u32 %v439, 4294901760
    %642 = vmatpush.msra.mxu0 %v641
    %v643 = vand.u32 %v438, 4294901760
    %644 = vmatpush.msra.mxu0 %v643
    %v645 = vand.u32 %v437, 4294901760
    %646 = vmatpush.msra.mxu0 %v645
    %v647 = vand.u32 %v436, 4294901760
    %648 = vmatpush.msra.mxu0 %v647
    %v649 = vand.u32 %v435, 4294901760
    %650 = vmatpush.msra.mxu0 %v649
    %v651 = vand.u32 %v434, 4294901760
    %652 = vmatpush.msra.mxu0 %v651
    %v653 = vand.u32 %v433, 4294901760
    %654 = vmatpush.msra.mxu0 %v653
    %v655 = vand.u32 %v432, 4294901760
    %656 = vmatpush.msra.mxu0 %v655
    %v657 = vand.u32 %v431, 4294901760
    %658 = vmatpush.msra.mxu0 %v657
    %v659 = vand.u32 %v430, 4294901760
    %660 = vmatpush.msra.mxu0 %v659
    %v661 = vand.u32 %v429, 4294901760
    %662 = vmatpush.msra.mxu0 %v661
    %v663 = vand.u32 %v428, 4294901760
    %664 = vmatpush.msra.mxu0 %v663
    %v665 = vand.u32 %v427, 4294901760
    %666 = vmatpush.msra.mxu0 %v665
    %v667 = vand.u32 %v426, 4294901760
    %668 = vmatpush.msra.mxu0 %v667
    %v669 = vand.u32 %v425, 4294901760
    %670 = vmatpush.msra.mxu0 %v669
    %v671 = vand.u32 %v424, 4294901760
    %672 = vmatpush.msra.mxu0 %v671
    %v673 = vand.u32 %v422, 4294901760
    %v674 = vsub.f32 %v422, %v673
    %v675 = vand.u32 %v674, 4294901760
    %676 = vmatmul.f32.gmra.mxu0 %v675
    %v677 = vpop.f32.mrf.mxu0
    %v678 = vadd.f32 %v639, %v677
    %679 = vdwg.mxu0
    %v680 = vand.u32 %v439, 4294901760
    %v681 = vsub.f32 %v439, %v680
    %v682 = vand.u32 %v681, 4294901760
    %683 = vmatpush.msra.mxu0 %v682
    %v684 = vand.u32 %v438, 4294901760
    %v685 = vsub.f32 %v438, %v684
    %v686 = vand.u32 %v685, 4294901760
    %687 = vmatpush.msra.mxu0 %v686
    %v688 = vand.u32 %v437, 4294901760
    %v689 = vsub.f32 %v437, %v688
    %v690 = vand.u32 %v689, 4294901760
    %691 = vmatpush.msra.mxu0 %v690
    %v692 = vand.u32 %v436, 4294901760
    %v693 = vsub.f32 %v436, %v692
    %v694 = vand.u32 %v693, 4294901760
    %695 = vmatpush.msra.mxu0 %v694
    %v696 = vand.u32 %v435, 4294901760
    %v697 = vsub.f32 %v435, %v696
    %v698 = vand.u32 %v697, 4294901760
    %699 = vmatpush.msra.mxu0 %v698
    %v700 = vand.u32 %v434, 4294901760
    %v701 = vsub.f32 %v434, %v700
    %v702 = vand.u32 %v701, 4294901760
    %703 = vmatpush.msra.mxu0 %v702
    %v704 = vand.u32 %v433, 4294901760
    %v705 = vsub.f32 %v433, %v704
    %v706 = vand.u32 %v705, 4294901760
    %707 = vmatpush.msra.mxu0 %v706
    %v708 = vand.u32 %v432, 4294901760
    %v709 = vsub.f32 %v432, %v708
    %v710 = vand.u32 %v709, 4294901760
    %711 = vmatpush.msra.mxu0 %v710
    %v712 = vand.u32 %v431, 4294901760
    %v713 = vsub.f32 %v431, %v712
    %v714 = vand.u32 %v713, 4294901760
    %715 = vmatpush.msra.mxu0 %v714
    %v716 = vand.u32 %v430, 4294901760
    %v717 = vsub.f32 %v430, %v716
    %v718 = vand.u32 %v717, 4294901760
    %719 = vmatpush.msra.mxu0 %v718
    %v720 = vand.u32 %v429, 4294901760
    %v721 = vsub.f32 %v429, %v720
    %v722 = vand.u32 %v721, 4294901760
    %723 = vmatpush.msra.mxu0 %v722
    %v724 = vand.u32 %v428, 4294901760
    %v725 = vsub.f32 %v428, %v724
    %v726 = vand.u32 %v725, 4294901760
    %727 = vmatpush.msra.mxu0 %v726
    %v728 = vand.u32 %v427, 4294901760
    %v729 = vsub.f32 %v427, %v728
    %v730 = vand.u32 %v729, 4294901760
    %731 = vmatpush.msra.mxu0 %v730
    %v732 = vand.u32 %v426, 4294901760
    %v733 = vsub.f32 %v426, %v732
    %v734 = vand.u32 %v733, 4294901760
    %735 = vmatpush.msra.mxu0 %v734
    %v736 = vand.u32 %v425, 4294901760
    %v737 = vsub.f32 %v425, %v736
    %v738 = vand.u32 %v737, 4294901760
    %739 = vmatpush.msra.mxu0 %v738
    %v740 = vand.u32 %v424, 4294901760
    %v741 = vsub.f32 %v424, %v740
    %v742 = vand.u32 %v741, 4294901760
    %743 = vmatpush.msra.mxu0 %v742
    %v744 = vand.u32 %v422, 4294901760
    %745 = vmatmul.f32.gmra.mxu0 %v744
    %v746 = vpop.f32.mrf.mxu0
    %v747 = vadd.f32 %v678, %v746
    %748 = vdwg.mxu0
    %v749 = vand.u32 %v439, 4294901760
    %750 = vmatpush.msra.mxu0 %v749
    %v751 = vand.u32 %v438, 4294901760
    %752 = vmatpush.msra.mxu0 %v751
    %v753 = vand.u32 %v437, 4294901760
    %754 = vmatpush.msra.mxu0 %v753
    %v755 = vand.u32 %v436, 4294901760
    %756 = vmatpush.msra.mxu0 %v755
    %v757 = vand.u32 %v435, 4294901760
    %758 = vmatpush.msra.mxu0 %v757
    %v759 = vand.u32 %v434, 4294901760
    %760 = vmatpush.msra.mxu0 %v759
    %v761 = vand.u32 %v433, 4294901760
    %762 = vmatpush.msra.mxu0 %v761
    %v763 = vand.u32 %v432, 4294901760
    %764 = vmatpush.msra.mxu0 %v763
    %v765 = vand.u32 %v431, 4294901760
    %766 = vmatpush.msra.mxu0 %v765
    %v767 = vand.u32 %v430, 4294901760
    %768 = vmatpush.msra.mxu0 %v767
    %v769 = vand.u32 %v429, 4294901760
    %770 = vmatpush.msra.mxu0 %v769
    %v771 = vand.u32 %v428, 4294901760
    %772 = vmatpush.msra.mxu0 %v771
    %v773 = vand.u32 %v427, 4294901760
    %774 = vmatpush.msra.mxu0 %v773
    %v775 = vand.u32 %v426, 4294901760
    %776 = vmatpush.msra.mxu0 %v775
    %v777 = vand.u32 %v425, 4294901760
    %778 = vmatpush.msra.mxu0 %v777
    %v779 = vand.u32 %v424, 4294901760
    %780 = vmatpush.msra.mxu0 %v779
    %v781 = vand.u32 %v422, 4294901760
    %782 = vmatmul.f32.gmra.mxu0 %v781
    %v783 = vpop.f32.mrf.mxu0
    %v784 = vadd.f32 %v747, %v783
    %785 = vdwg.mxu0
    %v786 = vmax.f32 %v784, 0.0
    %s787 = scalar_lea.vmem [#allocation5], 256
    %v788 = vld [vmem:[%s787] sm:$0xff]
    %v789 = vld [vmem:[%s787 + $0x8] sm:$0xff]
    %v790 = vld [vmem:[%s787 + $0x10] sm:$0xff]
    %v791 = vld [vmem:[%s787 + $0x18] sm:$0xff]
    %v792 = vld [vmem:[%s787 + $0x20] sm:$0xff]
    %v793 = vld [vmem:[%s787 + $0x28] sm:$0xff]
    %v794 = vld [vmem:[%s787 + $0x30] sm:$0xff]
    %v795 = vld [vmem:[%s787 + $0x38] sm:$0xff]
    %v796 = vld [vmem:[%s787 + $0x40] sm:$0xff]
    %v797 = vld [vmem:[%s787 + $0x48] sm:$0xff]
    %v798 = vld [vmem:[%s787 + $0x50] sm:$0xff]
    %v799 = vld [vmem:[%s787 + $0x58] sm:$0xff]
    %v800 = vld [vmem:[%s787 + $0x60] sm:$0xff]
    %v801 = vld [vmem:[%s787 + $0x68] sm:$0xff]
    %v802 = vld [vmem:[%s787 + $0x70] sm:$0xff]
    %v803 = vld [vmem:[%s787 + $0x78] sm:$0xff]
    %s804 = scalar_lea.vmem [#allocation7], 2
    %v805 = vld [vmem:[%s804] sm:$0x1]
    %v807 = vperm.slane %v805, 0
    %v809 = vand.u32 %v803, 4294901760
    %810 = vmatpush.msra.mxu0 %v809
    %v811 = vand.u32 %v802, 4294901760
    %812 = vmatpush.msra.mxu0 %v811
    %v813 = vand.u32 %v801, 4294901760
    %814 = vmatpush.msra.mxu0 %v813
    %v815 = vand.u32 %v800, 4294901760
    %816 = vmatpush.msra.mxu0 %v815
    %v817 = vand.u32 %v799, 4294901760
    %818 = vmatpush.msra.mxu0 %v817
    %v819 = vand.u32 %v798, 4294901760
    %820 = vmatpush.msra.mxu0 %v819
    %v821 = vand.u32 %v797, 4294901760
    %822 = vmatpush.msra.mxu0 %v821
    %v823 = vand.u32 %v796, 4294901760
    %824 = vmatpush.msra.mxu0 %v823
    %v825 = vand.u32 %v795, 4294901760
    %826 = vmatpush.msra.mxu0 %v825
    %v827 = vand.u32 %v794, 4294901760
    %828 = vmatpush.msra.mxu0 %v827
    %v829 = vand.u32 %v793, 4294901760
    %830 = vmatpush.msra.mxu0 %v829
    %v831 = vand.u32 %v792, 4294901760
    %832 = vmatpush.msra.mxu0 %v831
    %v833 = vand.u32 %v791, 4294901760
    %834 = vmatpush.msra.mxu0 %v833
    %v835 = vand.u32 %v790, 4294901760
    %836 = vmatpush.msra.mxu0 %v835
    %v837 = vand.u32 %v789, 4294901760
    %838 = vmatpush.msra.mxu0 %v837
    %v839 = vand.u32 %v788, 4294901760
    %840 = vmatpush.msra.mxu0 %v839
    %v841 = vand.u32 %v786, 4294901760
    %v842 = vsub.f32 %v786, %v841
    %v843 = vand.u32 %v842, 4294901760
    %v844 = vsub.f32 %v842, %v843
    %v845 = vand.u32 %v844, 4294901760
    %846 = vmatmul.f32.gmra.mxu0 %v845
    %v847 = vpop.f32.mrf.mxu0
    %v848 = vadd.f32 %v807, %v847
    %849 = vdwg.mxu0
    %v850 = vand.u32 %v803, 4294901760
    %v851 = vsub.f32 %v803, %v850
    %v852 = vand.u32 %v851, 4294901760
    %v853 = vsub.f32 %v851, %v852
    %v854 = vand.u32 %v853, 4294901760
    %855 = vmatpush.msra.mxu0 %v854
    %v856 = vand.u32 %v802, 4294901760
    %v857 = vsub.f32 %v802, %v856
    %v858 = vand.u32 %v857, 4294901760
    %v859 = vsub.f32 %v857, %v858
    %v860 = vand.u32 %v859, 4294901760
    %861 = vmatpush.msra.mxu0 %v860
    %v862 = vand.u32 %v801, 4294901760
    %v863 = vsub.f32 %v801, %v862
    %v864 = vand.u32 %v863, 4294901760
    %v865 = vsub.f32 %v863, %v864
    %v866 = vand.u32 %v865, 4294901760
    %867 = vmatpush.msra.mxu0 %v866
    %v868 = vand.u32 %v800, 4294901760
    %v869 = vsub.f32 %v800, %v868
    %v870 = vand.u32 %v869, 4294901760
    %v871 = vsub.f32 %v869, %v870
    %v872 = vand.u32 %v871, 4294901760
    %873 = vmatpush.msra.mxu0 %v872
    %v874 = vand.u32 %v799, 4294901760
    %v875 = vsub.f32 %v799, %v874
    %v876 = vand.u32 %v875, 4294901760
    %v877 = vsub.f32 %v875, %v876
    %v878 = vand.u32 %v877, 4294901760
    %879 = vmatpush.msra.mxu0 %v878
    %v880 = vand.u32 %v798, 4294901760
    %v881 = vsub.f32 %v798, %v880
    %v882 = vand.u32 %v881, 4294901760
    %v883 = vsub.f32 %v881, %v882
    %v884 = vand.u32 %v883, 4294901760
    %885 = vmatpush.msra.mxu0 %v884
    %v886 = vand.u32 %v797, 4294901760
    %v887 = vsub.f32 %v797, %v886
    %v888 = vand.u32 %v887, 4294901760
    %v889 = vsub.f32 %v887, %v888
    %v890 = vand.u32 %v889, 4294901760
    %891 = vmatpush.msra.mxu0 %v890
    %v892 = vand.u32 %v796, 4294901760
    %v893 = vsub.f32 %v796, %v892
    %v894 = vand.u32 %v893, 4294901760
    %v895 = vsub.f32 %v893, %v894
    %v896 = vand.u32 %v895, 4294901760
    %897 = vmatpush.msra.mxu0 %v896
    %v898 = vand.u32 %v795, 4294901760
    %v899 = vsub.f32 %v795, %v898
    %v900 = vand.u32 %v899, 4294901760
    %v901 = vsub.f32 %v899, %v900
    %v902 = vand.u32 %v901, 4294901760
    %903 = vmatpush.msra.mxu0 %v902
    %v904 = vand.u32 %v794, 4294901760
    %v905 = vsub.f32 %v794, %v904
    %v906 = vand.u32 %v905, 4294901760
    %v907 = vsub.f32 %v905, %v906
    %v908 = vand.u32 %v907, 4294901760
    %909 = vmatpush.msra.mxu0 %v908
    %v910 = vand.u32 %v793, 4294901760
    %v911 = vsub.f32 %v793, %v910
    %v912 = vand.u32 %v911, 4294901760
    %v913 = vsub.f32 %v911, %v912
    %v914 = vand.u32 %v913, 4294901760
    %915 = vmatpush.msra.mxu0 %v914
    %v916 = vand.u32 %v792, 4294901760
    %v917 = vsub.f32 %v792, %v916
    %v918 = vand.u32 %v917, 4294901760
    %v919 = vsub.f32 %v917, %v918
    %v920 = vand.u32 %v919, 4294901760
    %921 = vmatpush.msra.mxu0 %v920
    %v922 = vand.u32 %v791, 4294901760
    %v923 = vsub.f32 %v791, %v922
    %v924 = vand.u32 %v923, 4294901760
    %v925 = vsub.f32 %v923, %v924
    %v926 = vand.u32 %v925, 4294901760
    %927 = vmatpush.msra.mxu0 %v926
    %v928 = vand.u32 %v790, 4294901760
    %v929 = vsub.f32 %v790, %v928
    %v930 = vand.u32 %v929, 4294901760
    %v931 = vsub.f32 %v929, %v930
    %v932 = vand.u32 %v931, 4294901760
    %933 = vmatpush.msra.mxu0 %v932
    %v934 = vand.u32 %v789, 4294901760
    %v935 = vsub.f32 %v789, %v934
    %v936 = vand.u32 %v935, 4294901760
    %v937 = vsub.f32 %v935, %v936
    %v938 = vand.u32 %v937, 4294901760
    %939 = vmatpush.msra.mxu0 %v938
    %v940 = vand.u32 %v788, 4294901760
    %v941 = vsub.f32 %v788, %v940
    %v942 = vand.u32 %v941, 4294901760
    %v943 = vsub.f32 %v941, %v942
    %v944 = vand.u32 %v943, 4294901760
    %945 = vmatpush.msra.mxu0 %v944
    %v946 = vand.u32 %v786, 4294901760
    %947 = vmatmul.f32.gmra.mxu0 %v946
    %v948 = vpop.f32.mrf.mxu0
    %v949 = vadd.f32 %v848, %v948
    %950 = vdwg.mxu0
    %v951 = vand.u32 %v803, 4294901760
    %v952 = vsub.f32 %v803, %v951
    %953 = vmatpush.msra.mxu0 %v952
    %v954 = vand.u32 %v802, 4294901760
    %v955 = vsub.f32 %v802, %v954
    %956 = vmatpush.msra.mxu0 %v955
    %v957 = vand.u32 %v801, 4294901760
    %v958 = vsub.f32 %v801, %v957
    %959 = vmatpush.msra.mxu0 %v958
    %v960 = vand.u32 %v800, 4294901760
    %v961 = vsub.f32 %v800, %v960
    %962 = vmatpush.msra.mxu0 %v961
    %v963 = vand.u32 %v799, 4294901760
    %v964 = vsub.f32 %v799, %v963
    %965 = vmatpush.msra.mxu0 %v964
    %v966 = vand.u32 %v798, 4294901760
    %v967 = vsub.f32 %v798, %v966
    %968 = vmatpush.msra.mxu0 %v967
    %v969 = vand.u32 %v797, 4294901760
    %v970 = vsub.f32 %v797, %v969
    %971 = vmatpush.msra.mxu0 %v970
    %v972 = vand.u32 %v796, 4294901760
    %v973 = vsub.f32 %v796, %v972
    %974 = vmatpush.msra.mxu0 %v973
    %v975 = vand.u32 %v795, 4294901760
    %v976 = vsub.f32 %v795, %v975
    %977 = vmatpush.msra.mxu0 %v976
    %v978 = vand.u32 %v794, 4294901760
    %v979 = vsub.f32 %v794, %v978
    %980 = vmatpush.msra.mxu0 %v979
    %v981 = vand.u32 %v793, 4294901760
    %v982 = vsub.f32 %v793, %v981
    %983 = vmatpush.msra.mxu0 %v982
    %v984 = vand.u32 %v792, 4294901760
    %v985 = vsub.f32 %v792, %v984
    %986 = vmatpush.msra.mxu0 %v985
    %v987 = vand.u32 %v791, 4294901760
    %v988 = vsub.f32 %v791, %v987
    %989 = vmatpush.msra.mxu0 %v988
    %v990 = vand.u32 %v790, 4294901760
    %v991 = vsub.f32 %v790, %v990
    %992 = vmatpush.msra.mxu0 %v991
    %v993 = vand.u32 %v789, 4294901760
    %v994 = vsub.f32 %v789, %v993
    %995 = vmatpush.msra.mxu0 %v994
    %v996 = vand.u32 %v788, 4294901760
    %v997 = vsub.f32 %v788, %v996
    %998 = vmatpush.msra.mxu0 %v997
    %v999 = vand.u32 %v786, 4294901760
    %v1000 = vsub.f32 %v786, %v999
    %1001 = vmatmul.f32.gmra.mxu0 %v1000
    %v1002 = vpop.f32.mrf.mxu0
    %v1003 = vadd.f32 %v949, %v1002
    %1004 = vdwg.mxu0
    %v1005 = vand.u32 %v803, 4294901760
    %1006 = vmatpush.msra.mxu0 %v1005
    %v1007 = vand.u32 %v802, 4294901760
    %1008 = vmatpush.msra.mxu0 %v1007
    %v1009 = vand.u32 %v801, 4294901760
    %1010 = vmatpush.msra.mxu0 %v1009
    %v1011 = vand.u32 %v800, 4294901760
    %1012 = vmatpush.msra.mxu0 %v1011
    %v1013 = vand.u32 %v799, 4294901760
    %1014 = vmatpush.msra.mxu0 %v1013
    %v1015 = vand.u32 %v798, 4294901760
    %1016 = vmatpush.msra.mxu0 %v1015
    %v1017 = vand.u32 %v797, 4294901760
    %1018 = vmatpush.msra.mxu0 %v1017
    %v1019 = vand.u32 %v796, 4294901760
    %1020 = vmatpush.msra.mxu0 %v1019
    %v1021 = vand.u32 %v795, 4294901760
    %1022 = vmatpush.msra.mxu0 %v1021
    %v1023 = vand.u32 %v794, 4294901760
    %1024 = vmatpush.msra.mxu0 %v1023
    %v1025 = vand.u32 %v793, 4294901760
    %1026 = vmatpush.msra.mxu0 %v1025
    %v1027 = vand.u32 %v792, 4294901760
    %1028 = vmatpush.msra.mxu0 %v1027
    %v1029 = vand.u32 %v791, 4294901760
    %1030 = vmatpush.msra.mxu0 %v1029
    %v1031 = vand.u32 %v790, 4294901760
    %1032 = vmatpush.msra.mxu0 %v1031
    %v1033 = vand.u32 %v789, 4294901760
    %1034 = vmatpush.msra.mxu0 %v1033
    %v1035 = vand.u32 %v788, 4294901760
    %1036 = vmatpush.msra.mxu0 %v1035
    %v1037 = vand.u32 %v786, 4294901760
    %v1038 = vsub.f32 %v786, %v1037
    %v1039 = vand.u32 %v1038, 4294901760
    %1040 = vmatmul.f32.gmra.mxu0 %v1039
    %v1041 = vpop.f32.mrf.mxu0
    %v1042 = vadd.f32 %v1003, %v1041
    %1043 = vdwg.mxu0
    %v1044 = vand.u32 %v803, 4294901760
    %v1045 = vsub.f32 %v803, %v1044
    %v1046 = vand.u32 %v1045, 4294901760
    %1047 = vmatpush.msra.mxu0 %v1046
    %v1048 = vand.u32 %v802, 4294901760
    %v1049 = vsub.f32 %v802, %v1048
    %v1050 = vand.u32 %v1049, 4294901760
    %1051 = vmatpush.msra.mxu0 %v1050
    %v1052 = vand.u32 %v801, 4294901760
    %v1053 = vsub.f32 %v801, %v1052
    %v1054 = vand.u32 %v1053, 4294901760
    %1055 = vmatpush.msra.mxu0 %v1054
    %v1056 = vand.u32 %v800, 4294901760
    %v1057 = vsub.f32 %v800, %v1056
    %v1058 = vand.u32 %v1057, 4294901760
    %1059 = vmatpush.msra.mxu0 %v1058
    %v1060 = vand.u32 %v799, 4294901760
    %v1061 = vsub.f32 %v799, %v1060
    %v1062 = vand.u32 %v1061, 4294901760
    %1063 = vmatpush.msra.mxu0 %v1062
    %v1064 = vand.u32 %v798, 4294901760
    %v1065 = vsub.f32 %v798, %v1064
    %v1066 = vand.u32 %v1065, 4294901760
    %1067 = vmatpush.msra.mxu0 %v1066
    %v1068 = vand.u32 %v797, 4294901760
    %v1069 = vsub.f32 %v797, %v1068
    %v1070 = vand.u32 %v1069, 4294901760
    %1071 = vmatpush.msra.mxu0 %v1070
    %v1072 = vand.u32 %v796, 4294901760
    %v1073 = vsub.f32 %v796, %v1072
    %v1074 = vand.u32 %v1073, 4294901760
    %1075 = vmatpush.msra.mxu0 %v1074
    %v1076 = vand.u32 %v795, 4294901760
    %v1077 = vsub.f32 %v795, %v1076
    %v1078 = vand.u32 %v1077, 4294901760
    %1079 = vmatpush.msra.mxu0 %v1078
    %v1080 = vand.u32 %v794, 4294901760
    %v1081 = vsub.f32 %v794, %v1080
    %v1082 = vand.u32 %v1081, 4294901760
    %1083 = vmatpush.msra.mxu0 %v1082
    %v1084 = vand.u32 %v793, 4294901760
    %v1085 = vsub.f32 %v793, %v1084
    %v1086 = vand.u32 %v1085, 4294901760
    %1087 = vmatpush.msra.mxu0 %v1086
    %v1088 = vand.u32 %v792, 4294901760
    %v1089 = vsub.f32 %v792, %v1088
    %v1090 = vand.u32 %v1089, 4294901760
    %1091 = vmatpush.msra.mxu0 %v1090
    %v1092 = vand.u32 %v791, 4294901760
    %v1093 = vsub.f32 %v791, %v1092
    %v1094 = vand.u32 %v1093, 4294901760
    %1095 = vmatpush.msra.mxu0 %v1094
    %v1096 = vand.u32 %v790, 4294901760
    %v1097 = vsub.f32 %v790, %v1096
    %v1098 = vand.u32 %v1097, 4294901760
    %1099 = vmatpush.msra.mxu0 %v1098
    %v1100 = vand.u32 %v789, 4294901760
    %v1101 = vsub.f32 %v789, %v1100
    %v1102 = vand.u32 %v1101, 4294901760
    %1103 = vmatpush.msra.mxu0 %v1102
    %v1104 = vand.u32 %v788, 4294901760
    %v1105 = vsub.f32 %v788, %v1104
    %v1106 = vand.u32 %v1105, 4294901760
    %1107 = vmatpush.msra.mxu0 %v1106
    %v1108 = vand.u32 %v786, 4294901760
    %1109 = vmatmul.f32.gmra.mxu0 %v1108
    %v1110 = vpop.f32.mrf.mxu0
    %v1111 = vadd.f32 %v1042, %v1110
    %1112 = vdwg.mxu0
    %v1113 = vand.u32 %v803, 4294901760
    %1114 = vmatpush.msra.mxu0 %v1113
    %v1115 = vand.u32 %v802, 4294901760
    %1116 = vmatpush.msra.mxu0 %v1115
    %v1117 = vand.u32 %v801, 4294901760
    %1118 = vmatpush.msra.mxu0 %v1117
    %v1119 = vand.u32 %v800, 4294901760
    %1120 = vmatpush.msra.mxu0 %v1119
    %v1121 = vand.u32 %v799, 4294901760
    %1122 = vmatpush.msra.mxu0 %v1121
    %v1123 = vand.u32 %v798, 4294901760
    %1124 = vmatpush.msra.mxu0 %v1123
    %v1125 = vand.u32 %v797, 4294901760
    %1126 = vmatpush.msra.mxu0 %v1125
    %v1127 = vand.u32 %v796, 4294901760
    %1128 = vmatpush.msra.mxu0 %v1127
    %v1129 = vand.u32 %v795, 4294901760
    %1130 = vmatpush.msra.mxu0 %v1129
    %v1131 = vand.u32 %v794, 4294901760
    %1132 = vmatpush.msra.mxu0 %v1131
    %v1133 = vand.u32 %v793, 4294901760
    %1134 = vmatpush.msra.mxu0 %v1133
    %v1135 = vand.u32 %v792, 4294901760
    %1136 = vmatpush.msra.mxu0 %v1135
    %v1137 = vand.u32 %v791, 4294901760
    %1138 = vmatpush.msra.mxu0 %v1137
    %v1139 = vand.u32 %v790, 4294901760
    %1140 = vmatpush.msra.mxu0 %v1139
    %v1141 = vand.u32 %v789, 4294901760
    %1142 = vmatpush.msra.mxu0 %v1141
    %v1143 = vand.u32 %v788, 4294901760
    %1144 = vmatpush.msra.mxu0 %v1143
    %v1145 = vand.u32 %v786, 4294901760
    %1146 = vmatmul.f32.gmra.mxu0 %v1145
    %v1147 = vpop.f32.mrf.mxu0
    %v1148 = vadd.f32 %v1111, %v1147
    %1149 = vdwg.mxu0
    %v1150 = vmax.f32 %v1148, 0.0
    %s1151 = scalar_lea.vmem [#allocation5], 384
    %v1152 = vld [vmem:[%s1151] sm:$0xff]
    %v1153 = vld [vmem:[%s1151 + $0x8] sm:$0xff]
    %v1154 = vld [vmem:[%s1151 + $0x10] sm:$0xff]
    %v1155 = vld [vmem:[%s1151 + $0x18] sm:$0xff]
    %v1156 = vld [vmem:[%s1151 + $0x20] sm:$0xff]
    %v1157 = vld [vmem:[%s1151 + $0x28] sm:$0xff]
    %v1158 = vld [vmem:[%s1151 + $0x30] sm:$0xff]
    %v1159 = vld [vmem:[%s1151 + $0x38] sm:$0xff]
    %v1160 = vld [vmem:[%s1151 + $0x40] sm:$0xff]
    %v1161 = vld [vmem:[%s1151 + $0x48] sm:$0xff]
    %v1162 = vld [vmem:[%s1151 + $0x50] sm:$0xff]
    %v1163 = vld [vmem:[%s1151 + $0x58] sm:$0xff]
    %v1164 = vld [vmem:[%s1151 + $0x60] sm:$0xff]
    %v1165 = vld [vmem:[%s1151 + $0x68] sm:$0xff]
    %v1166 = vld [vmem:[%s1151 + $0x70] sm:$0xff]
    %v1167 = vld [vmem:[%s1151 + $0x78] sm:$0xff]
    %s1168 = scalar_lea.vmem [#allocation7], 3
    %v1169 = vld [vmem:[%s1168] sm:$0x1]
    %v1171 = vperm.slane %v1169, 0
    %v1173 = vand.u32 %v1167, 4294901760
    %1174 = vmatpush.msra.mxu0 %v1173
    %v1175 = vand.u32 %v1166, 4294901760
    %1176 = vmatpush.msra.mxu0 %v1175
    %v1177 = vand.u32 %v1165, 4294901760
    %1178 = vmatpush.msra.mxu0 %v1177
    %v1179 = vand.u32 %v1164, 4294901760
    %1180 = vmatpush.msra.mxu0 %v1179
    %v1181 = vand.u32 %v1163, 4294901760
    %1182 = vmatpush.msra.mxu0 %v1181
    %v1183 = vand.u32 %v1162, 4294901760
    %1184 = vmatpush.msra.mxu0 %v1183
    %v1185 = vand.u32 %v1161, 4294901760
    %1186 = vmatpush.msra.mxu0 %v1185
    %v1187 = vand.u32 %v1160, 4294901760
    %1188 = vmatpush.msra.mxu0 %v1187
    %v1189 = vand.u32 %v1159, 4294901760
    %1190 = vmatpush.msra.mxu0 %v1189
    %v1191 = vand.u32 %v1158, 4294901760
    %1192 = vmatpush.msra.mxu0 %v1191
    %v1193 = vand.u32 %v1157, 4294901760
    %1194 = vmatpush.msra.mxu0 %v1193
    %v1195 = vand.u32 %v1156, 4294901760
    %1196 = vmatpush.msra.mxu0 %v1195
    %v1197 = vand.u32 %v1155, 4294901760
    %1198 = vmatpush.msra.mxu0 %v1197
    %v1199 = vand.u32 %v1154, 4294901760
    %1200 = vmatpush.msra.mxu0 %v1199
    %v1201 = vand.u32 %v1153, 4294901760
    %1202 = vmatpush.msra.mxu0 %v1201
    %v1203 = vand.u32 %v1152, 4294901760
    %1204 = vmatpush.msra.mxu0 %v1203
    %v1205 = vand.u32 %v1150, 4294901760
    %v1206 = vsub.f32 %v1150, %v1205
    %v1207 = vand.u32 %v1206, 4294901760
    %v1208 = vsub.f32 %v1206, %v1207
    %v1209 = vand.u32 %v1208, 4294901760
    %1210 = vmatmul.f32.gmra.mxu0 %v1209
    %v1211 = vpop.f32.mrf.mxu0
    %v1212 = vadd.f32 %v1171, %v1211
    %1213 = vdwg.mxu0
    %v1214 = vand.u32 %v1167, 4294901760
    %v1215 = vsub.f32 %v1167, %v1214
    %v1216 = vand.u32 %v1215, 4294901760
    %v1217 = vsub.f32 %v1215, %v1216
    %v1218 = vand.u32 %v1217, 4294901760
    %1219 = vmatpush.msra.mxu0 %v1218
    %v1220 = vand.u32 %v1166, 4294901760
    %v1221 = vsub.f32 %v1166, %v1220
    %v1222 = vand.u32 %v1221, 4294901760
    %v1223 = vsub.f32 %v1221, %v1222
    %v1224 = vand.u32 %v1223, 4294901760
    %1225 = vmatpush.msra.mxu0 %v1224
    %v1226 = vand.u32 %v1165, 4294901760
    %v1227 = vsub.f32 %v1165, %v1226
    %v1228 = vand.u32 %v1227, 4294901760
    %v1229 = vsub.f32 %v1227, %v1228
    %v1230 = vand.u32 %v1229, 4294901760
    %1231 = vmatpush.msra.mxu0 %v1230
    %v1232 = vand.u32 %v1164, 4294901760
    %v1233 = vsub.f32 %v1164, %v1232
    %v1234 = vand.u32 %v1233, 4294901760
    %v1235 = vsub.f32 %v1233, %v1234
    %v1236 = vand.u32 %v1235, 4294901760
    %1237 = vmatpush.msra.mxu0 %v1236
    %v1238 = vand.u32 %v1163, 4294901760
    %v1239 = vsub.f32 %v1163, %v1238
    %v1240 = vand.u32 %v1239, 4294901760
    %v1241 = vsub.f32 %v1239, %v1240
    %v1242 = vand.u32 %v1241, 4294901760
    %1243 = vmatpush.msra.mxu0 %v1242
    %v1244 = vand.u32 %v1162, 4294901760
    %v1245 = vsub.f32 %v1162, %v1244
    %v1246 = vand.u32 %v1245, 4294901760
    %v1247 = vsub.f32 %v1245, %v1246
    %v1248 = vand.u32 %v1247, 4294901760
    %1249 = vmatpush.msra.mxu0 %v1248
    %v1250 = vand.u32 %v1161, 4294901760
    %v1251 = vsub.f32 %v1161, %v1250
    %v1252 = vand.u32 %v1251, 4294901760
    %v1253 = vsub.f32 %v1251, %v1252
    %v1254 = vand.u32 %v1253, 4294901760
    %1255 = vmatpush.msra.mxu0 %v1254
    %v1256 = vand.u32 %v1160, 4294901760
    %v1257 = vsub.f32 %v1160, %v1256
    %v1258 = vand.u32 %v1257, 4294901760
    %v1259 = vsub.f32 %v1257, %v1258
    %v1260 = vand.u32 %v1259, 4294901760
    %1261 = vmatpush.msra.mxu0 %v1260
    %v1262 = vand.u32 %v1159, 4294901760
    %v1263 = vsub.f32 %v1159, %v1262
    %v1264 = vand.u32 %v1263, 4294901760
    %v1265 = vsub.f32 %v1263, %v1264
    %v1266 = vand.u32 %v1265, 4294901760
    %1267 = vmatpush.msra.mxu0 %v1266
    %v1268 = vand.u32 %v1158, 4294901760
    %v1269 = vsub.f32 %v1158, %v1268
    %v1270 = vand.u32 %v1269, 4294901760
    %v1271 = vsub.f32 %v1269, %v1270
    %v1272 = vand.u32 %v1271, 4294901760
    %1273 = vmatpush.msra.mxu0 %v1272
    %v1274 = vand.u32 %v1157, 4294901760
    %v1275 = vsub.f32 %v1157, %v1274
    %v1276 = vand.u32 %v1275, 4294901760
    %v1277 = vsub.f32 %v1275, %v1276
    %v1278 = vand.u32 %v1277, 4294901760
    %1279 = vmatpush.msra.mxu0 %v1278
    %v1280 = vand.u32 %v1156, 4294901760
    %v1281 = vsub.f32 %v1156, %v1280
    %v1282 = vand.u32 %v1281, 4294901760
    %v1283 = vsub.f32 %v1281, %v1282
    %v1284 = vand.u32 %v1283, 4294901760
    %1285 = vmatpush.msra.mxu0 %v1284
    %v1286 = vand.u32 %v1155, 4294901760
    %v1287 = vsub.f32 %v1155, %v1286
    %v1288 = vand.u32 %v1287, 4294901760
    %v1289 = vsub.f32 %v1287, %v1288
    %v1290 = vand.u32 %v1289, 4294901760
    %1291 = vmatpush.msra.mxu0 %v1290
    %v1292 = vand.u32 %v1154, 4294901760
    %v1293 = vsub.f32 %v1154, %v1292
    %v1294 = vand.u32 %v1293, 4294901760
    %v1295 = vsub.f32 %v1293, %v1294
    %v1296 = vand.u32 %v1295, 4294901760
    %1297 = vmatpush.msra.mxu0 %v1296
    %v1298 = vand.u32 %v1153, 4294901760
    %v1299 = vsub.f32 %v1153, %v1298
    %v1300 = vand.u32 %v1299, 4294901760
    %v1301 = vsub.f32 %v1299, %v1300
    %v1302 = vand.u32 %v1301, 4294901760
    %1303 = vmatpush.msra.mxu0 %v1302
    %v1304 = vand.u32 %v1152, 4294901760
    %v1305 = vsub.f32 %v1152, %v1304
    %v1306 = vand.u32 %v1305, 4294901760
    %v1307 = vsub.f32 %v1305, %v1306
    %v1308 = vand.u32 %v1307, 4294901760
    %1309 = vmatpush.msra.mxu0 %v1308
    %v1310 = vand.u32 %v1150, 4294901760
    %1311 = vmatmul.f32.gmra.mxu0 %v1310
    %v1312 = vpop.f32.mrf.mxu0
    %v1313 = vadd.f32 %v1212, %v1312
    %1314 = vdwg.mxu0
    %v1315 = vand.u32 %v1167, 4294901760
    %v1316 = vsub.f32 %v1167, %v1315
    %1317 = vmatpush.msra.mxu0 %v1316
    %v1318 = vand.u32 %v1166, 4294901760
    %v1319 = vsub.f32 %v1166, %v1318
    %1320 = vmatpush.msra.mxu0 %v1319
    %v1321 = vand.u32 %v1165, 4294901760
    %v1322 = vsub.f32 %v1165, %v1321
    %1323 = vmatpush.msra.mxu0 %v1322
    %v1324 = vand.u32 %v1164, 4294901760
    %v1325 = vsub.f32 %v1164, %v1324
    %1326 = vmatpush.msra.mxu0 %v1325
    %v1327 = vand.u32 %v1163, 4294901760
    %v1328 = vsub.f32 %v1163, %v1327
    %1329 = vmatpush.msra.mxu0 %v1328
    %v1330 = vand.u32 %v1162, 4294901760
    %v1331 = vsub.f32 %v1162, %v1330
    %1332 = vmatpush.msra.mxu0 %v1331
    %v1333 = vand.u32 %v1161, 4294901760
    %v1334 = vsub.f32 %v1161, %v1333
    %1335 = vmatpush.msra.mxu0 %v1334
    %v1336 = vand.u32 %v1160, 4294901760
    %v1337 = vsub.f32 %v1160, %v1336
    %1338 = vmatpush.msra.mxu0 %v1337
    %v1339 = vand.u32 %v1159, 4294901760
    %v1340 = vsub.f32 %v1159, %v1339
    %1341 = vmatpush.msra.mxu0 %v1340
    %v1342 = vand.u32 %v1158, 4294901760
    %v1343 = vsub.f32 %v1158, %v1342
    %1344 = vmatpush.msra.mxu0 %v1343
    %v1345 = vand.u32 %v1157, 4294901760
    %v1346 = vsub.f32 %v1157, %v1345
    %1347 = vmatpush.msra.mxu0 %v1346
    %v1348 = vand.u32 %v1156, 4294901760
    %v1349 = vsub.f32 %v1156, %v1348
    %1350 = vmatpush.msra.mxu0 %v1349
    %v1351 = vand.u32 %v1155, 4294901760
    %v1352 = vsub.f32 %v1155, %v1351
    %1353 = vmatpush.msra.mxu0 %v1352
    %v1354 = vand.u32 %v1154, 4294901760
    %v1355 = vsub.f32 %v1154, %v1354
    %1356 = vmatpush.msra.mxu0 %v1355
    %v1357 = vand.u32 %v1153, 4294901760
    %v1358 = vsub.f32 %v1153, %v1357
    %1359 = vmatpush.msra.mxu0 %v1358
    %v1360 = vand.u32 %v1152, 4294901760
    %v1361 = vsub.f32 %v1152, %v1360
    %1362 = vmatpush.msra.mxu0 %v1361
    %v1363 = vand.u32 %v1150, 4294901760
    %v1364 = vsub.f32 %v1150, %v1363
    %1365 = vmatmul.f32.gmra.mxu0 %v1364
    %v1366 = vpop.f32.mrf.mxu0
    %v1367 = vadd.f32 %v1313, %v1366
    %1368 = vdwg.mxu0
    %v1369 = vand.u32 %v1167, 4294901760
    %1370 = vmatpush.msra.mxu0 %v1369
    %v1371 = vand.u32 %v1166, 4294901760
    %1372 = vmatpush.msra.mxu0 %v1371
    %v1373 = vand.u32 %v1165, 4294901760
    %1374 = vmatpush.msra.mxu0 %v1373
    %v1375 = vand.u32 %v1164, 4294901760
    %1376 = vmatpush.msra.mxu0 %v1375
    %v1377 = vand.u32 %v1163, 4294901760
    %1378 = vmatpush.msra.mxu0 %v1377
    %v1379 = vand.u32 %v1162, 4294901760
    %1380 = vmatpush.msra.mxu0 %v1379
    %v1381 = vand.u32 %v1161, 4294901760
    %1382 = vmatpush.msra.mxu0 %v1381
    %v1383 = vand.u32 %v1160, 4294901760
    %1384 = vmatpush.msra.mxu0 %v1383
    %v1385 = vand.u32 %v1159, 4294901760
    %1386 = vmatpush.msra.mxu0 %v1385
    %v1387 = vand.u32 %v1158, 4294901760
    %1388 = vmatpush.msra.mxu0 %v1387
    %v1389 = vand.u32 %v1157, 4294901760
    %1390 = vmatpush.msra.mxu0 %v1389
    %v1391 = vand.u32 %v1156, 4294901760
    %1392 = vmatpush.msra.mxu0 %v1391
    %v1393 = vand.u32 %v1155, 4294901760
    %1394 = vmatpush.msra.mxu0 %v1393
    %v1395 = vand.u32 %v1154, 4294901760
    %1396 = vmatpush.msra.mxu0 %v1395
    %v1397 = vand.u32 %v1153, 4294901760
    %1398 = vmatpush.msra.mxu0 %v1397
    %v1399 = vand.u32 %v1152, 4294901760
    %1400 = vmatpush.msra.mxu0 %v1399
    %v1401 = vand.u32 %v1150, 4294901760
    %v1402 = vsub.f32 %v1150, %v1401
    %v1403 = vand.u32 %v1402, 4294901760
    %1404 = vmatmul.f32.gmra.mxu0 %v1403
    %v1405 = vpop.f32.mrf.mxu0
    %v1406 = vadd.f32 %v1367, %v1405
    %1407 = vdwg.mxu0
    %v1408 = vand.u32 %v1167, 4294901760
    %v1409 = vsub.f32 %v1167, %v1408
    %v1410 = vand.u32 %v1409, 4294901760
    %1411 = vmatpush.msra.mxu0 %v1410
    %v1412 = vand.u32 %v1166, 4294901760
    %v1413 = vsub.f32 %v1166, %v1412
    %v1414 = vand.u32 %v1413, 4294901760
    %1415 = vmatpush.msra.mxu0 %v1414
    %v1416 = vand.u32 %v1165, 4294901760
    %v1417 = vsub.f32 %v1165, %v1416
    %v1418 = vand.u32 %v1417, 4294901760
    %1419 = vmatpush.msra.mxu0 %v1418
    %v1420 = vand.u32 %v1164, 4294901760
    %v1421 = vsub.f32 %v1164, %v1420
    %v1422 = vand.u32 %v1421, 4294901760
    %1423 = vmatpush.msra.mxu0 %v1422
    %v1424 = vand.u32 %v1163, 4294901760
    %v1425 = vsub.f32 %v1163, %v1424
    %v1426 = vand.u32 %v1425, 4294901760
    %1427 = vmatpush.msra.mxu0 %v1426
    %v1428 = vand.u32 %v1162, 4294901760
    %v1429 = vsub.f32 %v1162, %v1428
    %v1430 = vand.u32 %v1429, 4294901760
    %1431 = vmatpush.msra.mxu0 %v1430
    %v1432 = vand.u32 %v1161, 4294901760
    %v1433 = vsub.f32 %v1161, %v1432
    %v1434 = vand.u32 %v1433, 4294901760
    %1435 = vmatpush.msra.mxu0 %v1434
    %v1436 = vand.u32 %v1160, 4294901760
    %v1437 = vsub.f32 %v1160, %v1436
    %v1438 = vand.u32 %v1437, 4294901760
    %1439 = vmatpush.msra.mxu0 %v1438
    %v1440 = vand.u32 %v1159, 4294901760
    %v1441 = vsub.f32 %v1159, %v1440
    %v1442 = vand.u32 %v1441, 4294901760
    %1443 = vmatpush.msra.mxu0 %v1442
    %v1444 = vand.u32 %v1158, 4294901760
    %v1445 = vsub.f32 %v1158, %v1444
    %v1446 = vand.u32 %v1445, 4294901760
    %1447 = vmatpush.msra.mxu0 %v1446
    %v1448 = vand.u32 %v1157, 4294901760
    %v1449 = vsub.f32 %v1157, %v1448
    %v1450 = vand.u32 %v1449, 4294901760
    %1451 = vmatpush.msra.mxu0 %v1450
    %v1452 = vand.u32 %v1156, 4294901760
    %v1453 = vsub.f32 %v1156, %v1452
    %v1454 = vand.u32 %v1453, 4294901760
    %1455 = vmatpush.msra.mxu0 %v1454
    %v1456 = vand.u32 %v1155, 4294901760
    %v1457 = vsub.f32 %v1155, %v1456
    %v1458 = vand.u32 %v1457, 4294901760
    %1459 = vmatpush.msra.mxu0 %v1458
    %v1460 = vand.u32 %v1154, 4294901760
    %v1461 = vsub.f32 %v1154, %v1460
    %v1462 = vand.u32 %v1461, 4294901760
    %1463 = vmatpush.msra.mxu0 %v1462
    %v1464 = vand.u32 %v1153, 4294901760
    %v1465 = vsub.f32 %v1153, %v1464
    %v1466 = vand.u32 %v1465, 4294901760
    %1467 = vmatpush.msra.mxu0 %v1466
    %v1468 = vand.u32 %v1152, 4294901760
    %v1469 = vsub.f32 %v1152, %v1468
    %v1470 = vand.u32 %v1469, 4294901760
    %1471 = vmatpush.msra.mxu0 %v1470
    %v1472 = vand.u32 %v1150, 4294901760
    %1473 = vmatmul.f32.gmra.mxu0 %v1472
    %v1474 = vpop.f32.mrf.mxu0
    %v1475 = vadd.f32 %v1406, %v1474
    %1476 = vdwg.mxu0
    %v1477 = vand.u32 %v1167, 4294901760
    %1478 = vmatpush.msra.mxu0 %v1477
    %v1479 = vand.u32 %v1166, 4294901760
    %1480 = vmatpush.msra.mxu0 %v1479
    %v1481 = vand.u32 %v1165, 4294901760
    %1482 = vmatpush.msra.mxu0 %v1481
    %v1483 = vand.u32 %v1164, 4294901760
    %1484 = vmatpush.msra.mxu0 %v1483
    %v1485 = vand.u32 %v1163, 4294901760
    %1486 = vmatpush.msra.mxu0 %v1485
    %v1487 = vand.u32 %v1162, 4294901760
    %1488 = vmatpush.msra.mxu0 %v1487
    %v1489 = vand.u32 %v1161, 4294901760
    %1490 = vmatpush.msra.mxu0 %v1489
    %v1491 = vand.u32 %v1160, 4294901760
    %1492 = vmatpush.msra.mxu0 %v1491
    %v1493 = vand.u32 %v1159, 4294901760
    %1494 = vmatpush.msra.mxu0 %v1493
    %v1495 = vand.u32 %v1158, 4294901760
    %1496 = vmatpush.msra.mxu0 %v1495
    %v1497 = vand.u32 %v1157, 4294901760
    %1498 = vmatpush.msra.mxu0 %v1497
    %v1499 = vand.u32 %v1156, 4294901760
    %1500 = vmatpush.msra.mxu0 %v1499
    %v1501 = vand.u32 %v1155, 4294901760
    %1502 = vmatpush.msra.mxu0 %v1501
    %v1503 = vand.u32 %v1154, 4294901760
    %1504 = vmatpush.msra.mxu0 %v1503
    %v1505 = vand.u32 %v1153, 4294901760
    %1506 = vmatpush.msra.mxu0 %v1505
    %v1507 = vand.u32 %v1152, 4294901760
    %1508 = vmatpush.msra.mxu0 %v1507
    %v1509 = vand.u32 %v1150, 4294901760
    %1510 = vmatmul.f32.gmra.mxu0 %v1509
    %v1511 = vpop.f32.mrf.mxu0
    %v1512 = vadd.f32 %v1475, %v1511
    %1513 = vdwg.mxu0
    %1514 = vst [vmem:[#allocation8] sm:$0xff] %v1512
    // Predicated region
    $region26: #{tpu_custom_call.1} parent=1 // pred_check
      _
    $region27: #{tpu_custom_call.1} parent=1 // pred_check_branch
      %1516 = sbr.rel (0) target = $region29
    $region28: #{tpu_custom_call.1} parent=1 // pred_region
      %1518 = vsyncadd [#allocation4], 0
      %s1520 = sshll.u32 [#allocation8], 4
      %s1521 = int_to_ptr.vmem [resolvable:$true] %s1520
      %s1522 = sshll.u32 %s3, 4
      %s1523 = int_to_ptr.hbm [resolvable:$true] %s1522
      %1525 = dma.vmem_to_hbm [thread:$0]  %s1521, 128, %s1523, [#allocation4]
    $region29: #{tpu_custom_call.1} parent=1 // pred_fallthru
      _
    // Predicated region
    $region30: #{tpu_custom_call.1} parent=1 // pred_check
      _
    $region31: #{tpu_custom_call.1} parent=1 // pred_check_branch
      %1527 = sbr.rel (0) target = $region33
    $region32: #{tpu_custom_call.1} parent=1 // pred_region
      %1529 = dma.done [#allocation4], 128
    $region33: #{tpu_custom_call.1} parent=1 // pred_fallthru
      _
    %1530 = vsyncpa [#allocation3], 1
    %1531 = vsyncpa [#allocation6], 1
    %1532 = vsyncpa [#allocation4], 1

</llo_original>
